<compile_context>
chip_gen: v6e
topology: v6e:2x2x1
jax: 0.10.0
libtpu: 0.0.40
codegen_flags: <defaults>
</compile_context>

<pallas_src>
import functools
import math

import numpy as np

import jax
import jax.numpy as jnp
from jax.experimental import pallas as pl
from jax.experimental.pallas import tpu as pltpu


_EPS = 1e-5
_N_F32_TMP = 6                 # assumed live f32 (tm, width) intermediates in the body
_MAX_IN_BLOCK_BYTES = 8 << 20  # per-step input-block cap (diminishing returns past this)


def _round_up(a, m):
    return -(-a // m) * m


# ---------------------------------------------------------------------------
# Hardware queries (trace-time; with safe fallbacks)
# ---------------------------------------------------------------------------
def _vmem_capacity_bytes():
    try:
        return int(pltpu.get_tpu_info().vmem_capacity_bytes)
    except Exception:
        return 64 * 1024 * 1024          # conservative: v7x has 64 MiB per TensorCore


def _num_tensorcores():
    """TensorCores per chip (2 on v7x, 1 on v5e/v6e).  Defaults to 1 so that
    v5e/v6e never pay an extra grid step for nothing."""
    try:
        info = pltpu.get_tpu_info()
        for name in ("num_cores", "core_count", "num_tensorcores", "tensorcore_count"):
            v = getattr(info, name, None)
            if v:
                return max(1, min(2, int(v)))
    except Exception:
        pass
    return 1


def _vmem_budget():
    """(vmem_limit_bytes for the compiler, byte budget used to size row tiles)."""
    cap = _vmem_capacity_bytes()
    limit = max(32 * 1024 * 1024, min((cap * 3) // 4, 64 * 1024 * 1024))
    budget = limit - 4 * 1024 * 1024     # headroom: resident weight/sum matrices + scratch
    return int(limit), int(budget)


# ---------------------------------------------------------------------------
# Tiling helpers
# ---------------------------------------------------------------------------
def _min_grid_steps(n_rows, width, itemsize):
    if n_rows * width * itemsize < (4 << 20):
        return 1                          # tiny tensor: extra steps are pure overhead
    ncores = _num_tensorcores()
    return 1 if ncores <= 1 else 2 * ncores   # ~2 steps per core restores pipelining


def _pick_row_tile(n_rows, width, itemsize, row_align, *, budget_bytes,
                   row_tile=None, min_steps=1):
    """Rows per block, sized by BYTES (no fixed row cap).

    Accounts for: input + output blocks (each double-buffered by the Pallas
    pipeline) plus ~_N_F32_TMP live f32 intermediates materialized in the body.
    """
    if row_tile is not None:
        tm = int(row_tile)
    else:
        per_row = 2 * 2 * width * itemsize + _N_F32_TMP * width * 4
        tm = max(row_align, budget_bytes // per_row)
        tm = min(tm, max(row_align, _MAX_IN_BLOCK_BYTES // (width * itemsize)))
        if min_steps > 1 and n_rows > min_steps * row_align:
            # shard the "parallel" grid axis across TensorCores (v7x only; see
            # _num_tensorcores) while keeping >= 2 steps per core.
            tm = min(tm, _round_up(-(-n_rows // min_steps), row_align))
    if tm >= n_rows:
        return int(n_rows)           # block == full dim is always a legal block shape
    return int(max(row_align, (tm // row_align) * row_align))


# ---------------------------------------------------------------------------
# Kernels
# ---------------------------------------------------------------------------
def _plain_kernel(x_ref, w_ref, o_ref):
    """Per-row LayerNorm over the last dim (C lane-dense, or fallback path)."""
    x = x_ref[...].astype(jnp.float32)                    # (TM, C)
    w = w_ref[...].astype(jnp.float32)                    # (1, C)
    mu = jnp.mean(x, axis=-1, keepdims=True)
    var = jnp.mean(jnp.square(x - mu), axis=-1, keepdims=True)   # unbiased=False
    rstd = jax.lax.rsqrt(var + _EPS)
    # bias-free: x is NOT centered in the output; the mean only feeds the variance
    o_ref[...] = (x * rstd * w).astype(o_ref.dtype)


def _packed_kernel(x_ref, w_ref, a_ref, b_ref, o_ref, *, one_over_c, prec_reduce):
    """Lane-packed LayerNorm: each packed row holds G original rows of width C.

    x_ref : (TM, P)  with P = G*C (multiple of 128 -> lane-dense DMAs / stores)
    w_ref : (1, P)   weight tiled G times
    a_ref : (P, G)   0/1 lane->chunk summation matrix (exact)
    b_ref : (G, P)   0/1 chunk->lane broadcast matrix (exact)

    Per-chunk statistics ride the otherwise-idle MXU; rsqrt runs at chunk
    granularity (TM, G) on the EUP; only the per-row mean (needed for the
    centered variance) and 1/std are broadcast back onto the lanes.
    """
    hi = jax.lax.Precision.HIGHEST
    x = x_ref[...].astype(jnp.float32)                    # (TM, P)
    w = w_ref[...].astype(jnp.float32)                    # (1, P)
    a = a_ref[...]                                        # (P, G) f32, 0/1
    b = b_ref[...]                                        # (G, P) f32, 0/1
    # Per-original-row mean.  For bf16 inputs prec_reduce is DEFAULT (one bf16
    # MXU pass — exact for bf16 data with 0/1 weights and f32 accumulation);
    # HIGHEST only for genuine f32 inputs.
    mean_c = jnp.dot(x, a, precision=prec_reduce,
                     preferred_element_type=jnp.float32) * one_over_c    # (TM, G)
    # Broadcast is exact (0/1 matrix, f32 accumulation).
    mean_l = jnp.dot(mean_c, b, precision=hi,
                     preferred_element_type=jnp.float32)                 # (TM, P)
    cen = x - mean_l
    var_c = jnp.dot(cen * cen, a, precision=prec_reduce,
                    preferred_element_type=jnp.float32) * one_over_c     # (TM, G)
    rstd_c = jax.lax.rsqrt(var_c + _EPS)                                 # (TM, G)
    rstd_l = jnp.dot(rstd_c, b, precision=hi,
                     preferred_element_type=jnp.float32)                 # (TM, P)
    # bias-free: x is NOT centered in the output
    o_ref[...] = (x * rstd_l * w).astype(o_ref.dtype)


# ---------------------------------------------------------------------------
# Public wrapper
# ---------------------------------------------------------------------------
def biasfree_layernorm(x, weight, *, row_tile=None):
    """x: (..., C), weight: (C,). Returns the same shape/dtype as x."""
    orig_shape = x.shape
    C = int(orig_shape[-1])
    assert weight.shape == (C,)
    rows = int(math.prod(orig_shape[:-1])) if len(orig_shape) > 1 else 1
    x2 = x.reshape(rows, C)

    itemsize = jnp.dtype(x.dtype).itemsize
    row_align = max(8, 32 // itemsize)       # f32: 8 sublanes, bf16: 16, int8: 32
    vmem_limit, budget = _vmem_budget()
    cparams = pltpu.CompilerParams(
        dimension_semantics=("parallel",),
        vmem_limit_bytes=vmem_limit,
    )
    prec_reduce = (jax.lax.Precision.HIGHEST if x.dtype == jnp.float32
                   else jax.lax.Precision.DEFAULT)

    # Lane packing: fold G consecutive rows into one packed row of width
    # P = G*C (multiple of 128) so every HBM<->VMEM DMA uses all 128 lanes and
    # output stores are unmasked.  Only taken when rows % G == 0, so that both
    # reshapes are free contiguous views — no wrapper-side pad / slice passes.
    g = 1 if C % 128 == 0 else 128 // math.gcd(C, 128)
    P = g * C
    use_pack = (g > 1) and (g <= 32) and (P <= 1024) and (rows >= g) and (rows % g == 0)

    if use_pack:
        rows_p = rows // g
        xp = x2.reshape(rows_p, P)                     # free (contiguous) view
        wp = jnp.tile(weight, g).reshape(1, P)
        lane_grp = np.arange(P, dtype=np.int64) // C   # chunk id of each lane
        grp = np.arange(g, dtype=np.int64)
        a_mat = jnp.asarray((lane_grp[:, None] == grp[None, :]).astype(np.float32))
        b_mat = jnp.asarray((grp[:, None] == lane_grp[None, :]).astype(np.float32))

        tm = _pick_row_tile(rows_p, P, itemsize, row_align, budget_bytes=budget,
                            row_tile=row_tile,
                            min_steps=_min_grid_steps(rows_p, P, itemsize))
        grid = (pl.cdiv(rows_p, tm),)
        out = pl.pallas_call(
            functools.partial(_packed_kernel, one_over_c=1.0 / C,
                              prec_reduce=prec_reduce),
            out_shape=jax.ShapeDtypeStruct((rows_p, P), x.dtype),
            grid_spec=pltpu.PrefetchScalarGridSpec(
                num_scalar_prefetch=0,
                grid=grid,
                in_specs=[
                    pl.BlockSpec((tm, P), lambda i: (i, 0)),   # packed activations
                    pl.BlockSpec((1, P), lambda i: (0, 0)),    # tiled weight (resident)
                    pl.BlockSpec((P, g), lambda i: (0, 0)),    # sum matrix (resident)
                    pl.BlockSpec((g, P), lambda i: (0, 0)),    # broadcast matrix
                ],
                out_specs=pl.BlockSpec((tm, P), lambda i: (i, 0)),
            ),
            compiler_params=cparams,
        )(xp, wp, a_mat, b_mat)
        return out.reshape(orig_shape)                 # free view back

    # Plain path: C is already a multiple of 128 (lane-dense), or packing is
    # impossible (rows % G != 0 — a lane-sparse block is cheaper than the two
    # extra full HBM passes a pad + slice would cost).
    tm = _pick_row_tile(rows, C, itemsize, row_align, budget_bytes=budget,
                        row_tile=row_tile,
                        min_steps=_min_grid_steps(rows, C, itemsize))
    grid = (pl.cdiv(rows, tm),)
    out = pl.pallas_call(
        _plain_kernel,
        out_shape=jax.ShapeDtypeStruct((rows, C), x.dtype),
        grid_spec=pltpu.PrefetchScalarGridSpec(
            num_scalar_prefetch=0,
            grid=grid,
            in_specs=[
                pl.BlockSpec((tm, C), lambda i: (i, 0)),
                pl.BlockSpec((1, C), lambda i: (0, 0)),
            ],
            out_specs=pl.BlockSpec((tm, C), lambda i: (i, 0)),
        ),
        compiler_params=cparams,
    )(x2, weight.reshape(1, C))
    return out.reshape(orig_shape)


# ---------------------------------------------------------------------------
# Reference + self-test
# ---------------------------------------------------------------------------
def _reference(x, weight):
    xf = x.astype(jnp.float32)
    mu = jnp.mean(xf, axis=-1, keepdims=True)
    var = jnp.mean(jnp.square(xf - mu), axis=-1, keepdims=True)
    return (xf / jnp.sqrt(var + _EPS) * weight.astype(jnp.float32)).astype(x.dtype)


if __name__ == "__main__":
    key = jax.random.PRNGKey(0)
    ks = jax.random.split(key, 10)

    # 1) Restormer-style (B, H*W, C) with small C -> packed lane-dense path (G=4, P=128)
    x1 = jax.random.normal(ks[0], (2, 64, 32), dtype=jnp.float32)
    w1 = jnp.ones((32,), dtype=jnp.float32)               # module init: torch.ones
    o1 = jax.block_until_ready(biasfree_layernorm(x1, w1))
    r1 = _reference(x1, w1)
    assert o1.shape == x1.shape and o1.dtype == x1.dtype
    assert float(jnp.max(jnp.abs(o1 - r1))) < 1e-3, "packed path mismatch (C=32)"

    # 2) rows not divisible by the pack factor -> plain path (no pad/slice passes)
    x2 = jax.random.normal(ks[1], (2, 30, 48), dtype=jnp.float32)
    w2 = jax.random.normal(ks[2], (48,), dtype=jnp.float32)
    o2 = jax.block_until_ready(biasfree_layernorm(x2, w2))
    r2 = _reference(x2, w2)
    assert o2.shape == x2.shape and o2.dtype == x2.dtype
    assert float(jnp.max(jnp.abs(o2 - r2))) < 1e-3, "plain path mismatch (C=48, ragged rows)"

    # 3) C=48 with rows % G == 0 -> packed path (G=8, P=384), bf16 on the wire
    x3 = jax.random.normal(ks[3], (2, 64, 48), dtype=jnp.bfloat16)
    w3 = jax.random.normal(ks[4], (48,), dtype=jnp.bfloat16)
    o3 = jax.block_until_ready(biasfree_layernorm(x3, w3))
    r3 = _reference(x3, w3)
    assert o3.shape == x3.shape and o3.dtype == x3.dtype
    assert jnp.allclose(o3.astype(jnp.float32), r3.astype(jnp.float32),
                        rtol=2e-2, atol=2e-2), "packed path mismatch (bf16, C=48)"

    # 4) C multiple of 128 -> plain lane-dense path, bf16
    x4 = jax.random.normal(ks[5], (2, 40, 128), dtype=jnp.bfloat16)
    w4 = jax.random.normal(ks[6], (128,), dtype=jnp.bfloat16)
    o4 = jax.block_until_ready(biasfree_layernorm(x4, w4))
    r4 = _reference(x4, w4)
    assert o4.shape == x4.shape and o4.dtype == x4.dtype
    assert jnp.allclose(o4.astype(jnp.float32), r4.astype(jnp.float32),
                        rtol=2e-2, atol=2e-2), "plain path mismatch (bf16, C=128)"

    # 5) forced small row tile -> exercises the masked partial last grid block
    x5 = jax.random.normal(ks[7], (2, 56, 32), dtype=jnp.float32)
    w5 = jax.random.normal(ks[8], (32,), dtype=jnp.float32)
    o5 = jax.block_until_ready(biasfree_layernorm(x5, w5, row_tile=16))
    r5 = _reference(x5, w5)
    assert o5.shape == x5.shape and o5.dtype == x5.dtype
    assert float(jnp.max(jnp.abs(o5 - r5))) < 1e-3, "packed path mismatch (partial block)"

    print("KERNEL_OK")
</pallas_src>

<mosaic_0001>
module attributes {stable_mosaic.version = 11 : i64} {
  func.func @_packed_kernel(%arg0: i32, %arg1: memref<32x128xf32, #tpu.memory_space<vmem>>, %arg2: memref<1x128xf32, #tpu.memory_space<vmem>>, %arg3: memref<128x4xf32, #tpu.memory_space<vmem>>, %arg4: memref<4x128xf32, #tpu.memory_space<vmem>>, %arg5: memref<32x128xf32, #tpu.memory_space<vmem>>) attributes {dimension_semantics = [#tpu.dimension_semantics<parallel>], iteration_bounds = array<i64: 1>, scalar_prefetch = 0 : i64, scratch_operands = 0 : i64, tpu.core_type = #tpu.core_type<tc>, window_params = [{transform_indices = @transform_0, window_bounds = array<i64: 32, 128>}, {pipeline_mode = #tpu.pipeline_mode<synchronous>, transform_indices = @transform_1, window_bounds = array<i64: 1, 128>}, {pipeline_mode = #tpu.pipeline_mode<synchronous>, transform_indices = @transform_2, window_bounds = array<i64: 128, 4>}, {pipeline_mode = #tpu.pipeline_mode<synchronous>, transform_indices = @transform_3, window_bounds = array<i64: 4, 128>}, {transform_indices = @transform_4, window_bounds = array<i64: 32, 128>}]} {
    %c0 = arith.constant 0 : index
    %c0_0 = arith.constant 0 : index
    %0 = vector.load %arg1[%c0, %c0_0] : memref<32x128xf32, #tpu.memory_space<vmem>>, vector<32x128xf32>
    %c0_1 = arith.constant 0 : index
    %c0_2 = arith.constant 0 : index
    %1 = vector.load %arg2[%c0_1, %c0_2] : memref<1x128xf32, #tpu.memory_space<vmem>>, vector<1x128xf32>
    %c0_3 = arith.constant 0 : index
    %c0_4 = arith.constant 0 : index
    %2 = vector.load %arg3[%c0_3, %c0_4] : memref<128x4xf32, #tpu.memory_space<vmem>>, vector<128x4xf32>
    %c0_5 = arith.constant 0 : index
    %c0_6 = arith.constant 0 : index
    %3 = vector.load %arg4[%c0_5, %c0_6] : memref<4x128xf32, #tpu.memory_space<vmem>>, vector<4x128xf32>
    %cst = arith.constant dense<0.000000e+00> : vector<32x4xf32>
    %4 = tpu.matmul %0, %2, %cst {dimension_numbers = #tpu.dot_dimension_numbers<[1], [0], [0], [1], [0, 0, 1, 1], [], []>, precision = #tpu.contract_precision<fp32>} : vector<32x128xf32>, vector<128x4xf32>, vector<32x4xf32> -> vector<32x4xf32>
    %cst_7 = arith.constant 3.125000e-02 : f32
    %5 = vector.broadcast %cst_7 : f32 to vector<32x4xf32>
    %6 = arith.mulf %4, %5 : vector<32x4xf32>
    %cst_8 = arith.constant dense<0.000000e+00> : vector<32x128xf32>
    %7 = tpu.matmul %6, %3, %cst_8 {dimension_numbers = #tpu.dot_dimension_numbers<[1], [0], [0], [1], [0, 0, 1, 1], [], []>, precision = #tpu.contract_precision<fp32>} : vector<32x4xf32>, vector<4x128xf32>, vector<32x128xf32> -> vector<32x128xf32>
    %8 = arith.subf %0, %7 : vector<32x128xf32>
    %9 = arith.mulf %8, %8 : vector<32x128xf32>
    %cst_9 = arith.constant dense<0.000000e+00> : vector<32x4xf32>
    %10 = tpu.matmul %9, %2, %cst_9 {dimension_numbers = #tpu.dot_dimension_numbers<[1], [0], [0], [1], [0, 0, 1, 1], [], []>, precision = #tpu.contract_precision<fp32>} : vector<32x128xf32>, vector<128x4xf32>, vector<32x4xf32> -> vector<32x4xf32>
    %cst_10 = arith.constant 3.125000e-02 : f32
    %11 = vector.broadcast %cst_10 : f32 to vector<32x4xf32>
    %12 = arith.mulf %10, %11 : vector<32x4xf32>
    %cst_11 = arith.constant 9.99999974E-6 : f32
    %13 = vector.broadcast %cst_11 : f32 to vector<32x4xf32>
    %14 = arith.addf %12, %13 : vector<32x4xf32>
    %15 = math.rsqrt %14 : vector<32x4xf32>
    %cst_12 = arith.constant dense<0.000000e+00> : vector<32x128xf32>
    %16 = tpu.matmul %15, %3, %cst_12 {dimension_numbers = #tpu.dot_dimension_numbers<[1], [0], [0], [1], [0, 0, 1, 1], [], []>, precision = #tpu.contract_precision<fp32>} : vector<32x4xf32>, vector<4x128xf32>, vector<32x128xf32> -> vector<32x128xf32>
    %17 = arith.mulf %0, %16 : vector<32x128xf32>
    %18 = vector.broadcast %1 : vector<1x128xf32> to vector<32x128xf32>
    %19 = arith.mulf %17, %18 : vector<32x128xf32>
    %c0_13 = arith.constant 0 : index
    %c0_14 = arith.constant 0 : index
    %20 = vector.load %arg5[%c0_13, %c0_14] : memref<32x128xf32, #tpu.memory_space<vmem>>, vector<32x128xf32>
    tpu.vector_store %arg5[%c0_13, %c0_14], %19 {strides = array<i32>} : memref<32x128xf32, #tpu.memory_space<vmem>>, vector<32x128xf32>,
    return
  }
  func.func @transform_0(%arg0: i32) -> (i32, i32) {
    %c0_i32 = arith.constant 0 : i32
    %c0_i32_0 = arith.constant 0 : i32
    return %arg0, %c0_i32 : i32, i32
  }
  func.func @transform_1(%arg0: i32) -> (i32, i32) {
    %c0_i32 = arith.constant 0 : i32
    %c0_i32_0 = arith.constant 0 : i32
    %c0_i32_1 = arith.constant 0 : i32
    return %c0_i32, %c0_i32_0 : i32, i32
  }
  func.func @transform_2(%arg0: i32) -> (i32, i32) {
    %c0_i32 = arith.constant 0 : i32
    %c0_i32_0 = arith.constant 0 : i32
    %c0_i32_1 = arith.constant 0 : i32
    return %c0_i32, %c0_i32_0 : i32, i32
  }
  func.func @transform_3(%arg0: i32) -> (i32, i32) {
    %c0_i32 = arith.constant 0 : i32
    %c0_i32_0 = arith.constant 0 : i32
    %c0_i32_1 = arith.constant 0 : i32
    return %c0_i32, %c0_i32_0 : i32, i32
  }
  func.func @transform_4(%arg0: i32) -> (i32, i32) {
    %c0_i32 = arith.constant 0 : i32
    %c0_i32_0 = arith.constant 0 : i32
    return %arg0, %c0_i32 : i32, i32
  }
}

</mosaic_0001>

<llo_original>
// kernel: tpu_custom_call.1
$region0: #{tpu_custom_call.1}
  #allocation0 [shape = 'u32[]', space=smem, size = 0x4, offset = 0x4, fixed_abs, tag = 'smem constant byte address 0x4 - core index']
  #allocation1 [shape = 'u32[144,128]{1,0:T(1,128)}', space=vmem, size = 0x12000, scoped, tag = 'internal scratch']
  %s0 = inlined_call_operand.vmem [shape: f32[32,128], index: 0, kind: input, shape index: {}]
  %s1 = inlined_call_operand.vmem [shape: f32[1,128], index: 1, kind: input, shape index: {}]
  %s2 = inlined_call_operand.vmem [shape: f32[128,4], index: 2, kind: input, shape index: {}]
  %s3 = inlined_call_operand.vmem [shape: f32[4,128], index: 3, kind: input, shape index: {}]
  %s4 = inlined_call_operand.hbm [shape: f32[32,128], index: 4, kind: output, shape index: {}]
  %s5 = sld [smem:[#allocation0]]
  $region26: #{tpu_custom_call.1} parent=0
    _
  %s7 = ssub.s32 1, %s5
  %s8 = scalar_select 0, %s7, %s5
  $region1: #{tpu_custom_call.1} parent=0
    #allocation2 [shape = 'u8[16384]{0}', space=vmem, size = 0x4000, scoped, tag = 'output window, operand 0, single buffered']
    #allocation3 [shape = 's32[1]{0}', space=sflag, size = 0x4, scoped, tag = 'scoped memory for tpu_custom_call.1']
    %9 = vsyncpa [#allocation3], 0
    // Predicated region
    $region2: #{tpu_custom_call.1} parent=1 // pred_check
      _
    $region3: #{tpu_custom_call.1} parent=1 // pred_check_branch
      %11 = sbr.rel (0) target = $region5
    $region4: #{tpu_custom_call.1} parent=1 // pred_region
      _
    $region5: #{tpu_custom_call.1} parent=1 // pred_fallthru
      _
    // Predicated region
    $region6: #{tpu_custom_call.1} parent=1 // pred_check
      _
    $region7: #{tpu_custom_call.1} parent=1 // pred_check_branch
      %13 = sbr.rel (0) target = $region9
    $region8: #{tpu_custom_call.1} parent=1 // pred_region
      _
    $region9: #{tpu_custom_call.1} parent=1 // pred_fallthru
      _
    // Predicated region
    $region10: #{tpu_custom_call.1} parent=1 // pred_check
      _
    $region11: #{tpu_custom_call.1} parent=1 // pred_check_branch
      %15 = sbr.rel (0) target = $region13
    $region12: #{tpu_custom_call.1} parent=1 // pred_region
      _
    $region13: #{tpu_custom_call.1} parent=1 // pred_fallthru
      _
    // Predicated region
    $region14: #{tpu_custom_call.1} parent=1 // pred_check
      _
    $region15: #{tpu_custom_call.1} parent=1 // pred_check_branch
      %17 = sbr.rel (0) target = $region17
    $region16: #{tpu_custom_call.1} parent=1 // pred_region
      _
    $region17: #{tpu_custom_call.1} parent=1 // pred_fallthru
      _
    %v18 = vld [vmem:[%s0] sm:$0xff]
    %v19 = vld [vmem:[%s0 + $0x8] sm:$0xff]
    %v20 = vld [vmem:[%s0 + $0x10] sm:$0xff]
    %v21 = vld [vmem:[%s0 + $0x18] sm:$0xff]
    %v22 = vld [vmem:[%s1] sm:$0x1]
    %v23 = vld [vmem:[%s2] sm:$0xff]
    %v24 = vld [vmem:[%s2 + $0x8] sm:$0xff]
    %v25 = vld [vmem:[%s2 + $0x10] sm:$0xff]
    %v26 = vld [vmem:[%s2 + $0x18] sm:$0xff]
    %v27 = vld [vmem:[%s2 + $0x20] sm:$0xff]
    %v28 = vld [vmem:[%s2 + $0x28] sm:$0xff]
    %v29 = vld [vmem:[%s2 + $0x30] sm:$0xff]
    %v30 = vld [vmem:[%s2 + $0x38] sm:$0xff]
    %v31 = vld [vmem:[%s2 + $0x40] sm:$0xff]
    %v32 = vld [vmem:[%s2 + $0x48] sm:$0xff]
    %v33 = vld [vmem:[%s2 + $0x50] sm:$0xff]
    %v34 = vld [vmem:[%s2 + $0x58] sm:$0xff]
    %v35 = vld [vmem:[%s2 + $0x60] sm:$0xff]
    %v36 = vld [vmem:[%s2 + $0x68] sm:$0xff]
    %v37 = vld [vmem:[%s2 + $0x70] sm:$0xff]
    %v38 = vld [vmem:[%s2 + $0x78] sm:$0xff]
    %v39 = vld [vmem:[%s3] sm:$0xf]
    %40 = vmatprep.subr.mxu0 0.0
    %v41 = vand.u32 %v38, 4294901760
    %42 = vmatpush1.msra.mxu0 %v41
    %43 = vmatprep.subr.mxu0 0.0
    %v44 = vand.u32 %v37, 4294901760
    %45 = vmatpush1.msra.mxu0 %v44
    %46 = vmatprep.subr.mxu0 0.0
    %v47 = vand.u32 %v36, 4294901760
    %48 = vmatpush1.msra.mxu0 %v47
    %49 = vmatprep.subr.mxu0 0.0
    %v50 = vand.u32 %v35, 4294901760
    %51 = vmatpush1.msra.mxu0 %v50
    %52 = vmatprep.subr.mxu0 0.0
    %v53 = vand.u32 %v34, 4294901760
    %54 = vmatpush1.msra.mxu0 %v53
    %55 = vmatprep.subr.mxu0 0.0
    %v56 = vand.u32 %v33, 4294901760
    %57 = vmatpush1.msra.mxu0 %v56
    %58 = vmatprep.subr.mxu0 0.0
    %v59 = vand.u32 %v32, 4294901760
    %60 = vmatpush1.msra.mxu0 %v59
    %61 = vmatprep.subr.mxu0 0.0
    %v62 = vand.u32 %v31, 4294901760
    %63 = vmatpush1.msra.mxu0 %v62
    %64 = vmatprep.subr.mxu0 0.0
    %v65 = vand.u32 %v30, 4294901760
    %66 = vmatpush1.msra.mxu0 %v65
    %67 = vmatprep.subr.mxu0 0.0
    %v68 = vand.u32 %v29, 4294901760
    %69 = vmatpush1.msra.mxu0 %v68
    %70 = vmatprep.subr.mxu0 0.0
    %v71 = vand.u32 %v28, 4294901760
    %72 = vmatpush1.msra.mxu0 %v71
    %73 = vmatprep.subr.mxu0 0.0
    %v74 = vand.u32 %v27, 4294901760
    %75 = vmatpush1.msra.mxu0 %v74
    %76 = vmatprep.subr.mxu0 0.0
    %v77 = vand.u32 %v26, 4294901760
    %78 = vmatpush1.msra.mxu0 %v77
    %79 = vmatprep.subr.mxu0 0.0
    %v80 = vand.u32 %v25, 4294901760
    %81 = vmatpush1.msra.mxu0 %v80
    %82 = vmatprep.subr.mxu0 0.0
    %v83 = vand.u32 %v24, 4294901760
    %84 = vmatpush1.msra.mxu0 %v83
    %85 = vmatprep.subr.mxu0 0.0
    %v86 = vand.u32 %v23, 4294901760
    %87 = vmatpush1.msra.mxu0 %v86
    %88 = vmatprep.subr.mxu0 0.0
    %89 = vmatpush2.msra.mxu0 0.0
    %90 = vmatprep.subr.mxu0 0.0
    %91 = vmatpush2.msra.mxu0 0.0
    %92 = vmatprep.subr.mxu0 0.0
    %93 = vmatpush2.msra.mxu0 0.0
    %94 = vmatprep.subr.mxu0 0.0
    %95 = vmatpush2.msra.mxu0 0.0
    %96 = vmatprep.subr.mxu0 0.0
    %97 = vmatpush2.msra.mxu0 0.0
    %98 = vmatprep.subr.mxu0 0.0
    %99 = vmatpush2.msra.mxu0 0.0
    %100 = vmatprep.subr.mxu0 0.0
    %101 = vmatpush2.msra.mxu0 0.0
    %102 = vmatprep.subr.mxu0 0.0
    %103 = vmatpush2.msra.mxu0 0.0
    %104 = vmatprep.subr.mxu0 0.0
    %105 = vmatpush2.msra.mxu0 0.0
    %106 = vmatprep.subr.mxu0 0.0
    %107 = vmatpush2.msra.mxu0 0.0
    %108 = vmatprep.subr.mxu0 0.0
    %109 = vmatpush2.msra.mxu0 0.0
    %110 = vmatprep.subr.mxu0 0.0
    %111 = vmatpush2.msra.mxu0 0.0
    %112 = vmatprep.subr.mxu0 0.0
    %113 = vmatpush2.msra.mxu0 0.0
    %114 = vmatprep.subr.mxu0 0.0
    %115 = vmatpush2.msra.mxu0 0.0
    %116 = vmatprep.subr.mxu0 0.0
    %117 = vmatpush2.msra.mxu0 0.0
    %118 = vmatprep.subr.mxu0 0.0
    %119 = vmatpush2.msra.mxu0 0.0
    %120 = vmatprep.mubr.f32.mxu0 0.0
    %v121 = vand.u32 %v18, 4294901760
    %v122 = vsub.f32 %v18, %v121
    %v123 = vand.u32 %v122, 4294901760
    %v124 = vsub.f32 %v122, %v123
    %v125 = vand.u32 %v124, 4294901760
    %126 = vmatmul.mubr.f32.gmra.mxu0 %v125
    %v127 = vpop.f32.mrf.mxu0
    %v128 = vadd.f32 0.0, %v127
    %v129 = vpop.f32.mrf.mxu0
    %130 = vmatprep.mubr.f32.mxu0 0.0
    %v131 = vand.u32 %v19, 4294901760
    %v132 = vsub.f32 %v19, %v131
    %v133 = vand.u32 %v132, 4294901760
    %v134 = vsub.f32 %v132, %v133
    %v135 = vand.u32 %v134, 4294901760
    %136 = vmatmul.mubr.f32.gmra.mxu0 %v135
    %v137 = vpop.f32.mrf.mxu0
    %v138 = vadd.f32 0.0, %v137
    %v139 = vpop.f32.mrf.mxu0
    %140 = vmatprep.mubr.f32.mxu0 0.0
    %v141 = vand.u32 %v20, 4294901760
    %v142 = vsub.f32 %v20, %v141
    %v143 = vand.u32 %v142, 4294901760
    %v144 = vsub.f32 %v142, %v143
    %v145 = vand.u32 %v144, 4294901760
    %146 = vmatmul.mubr.f32.gmra.mxu0 %v145
    %v147 = vpop.f32.mrf.mxu0
    %v148 = vadd.f32 0.0, %v147
    %v149 = vpop.f32.mrf.mxu0
    %150 = vmatprep.mubr.f32.mxu0 0.0
    %v151 = vand.u32 %v21, 4294901760
    %v152 = vsub.f32 %v21, %v151
    %v153 = vand.u32 %v152, 4294901760
    %v154 = vsub.f32 %v152, %v153
    %v155 = vand.u32 %v154, 4294901760
    %156 = vmatmul.mubr.f32.gmra.mxu0 %v155
    %v157 = vpop.f32.mrf.mxu0
    %v158 = vadd.f32 0.0, %v157
    %v159 = vpop.f32.mrf.mxu0
    %160 = vdwg.mxu0
    %161 = vmatprep.subr.mxu0 0.0
    %v162 = vand.u32 %v38, 4294901760
    %v163 = vsub.f32 %v38, %v162
    %v164 = vand.u32 %v163, 4294901760
    %v165 = vsub.f32 %v163, %v164
    %v166 = vand.u32 %v165, 4294901760
    %167 = vmatpush1.msra.mxu0 %v166
    %168 = vmatprep.subr.mxu0 0.0
    %v169 = vand.u32 %v37, 4294901760
    %v170 = vsub.f32 %v37, %v169
    %v171 = vand.u32 %v170, 4294901760
    %v172 = vsub.f32 %v170, %v171
    %v173 = vand.u32 %v172, 4294901760
    %174 = vmatpush1.msra.mxu0 %v173
    %175 = vmatprep.subr.mxu0 0.0
    %v176 = vand.u32 %v36, 4294901760
    %v177 = vsub.f32 %v36, %v176
    %v178 = vand.u32 %v177, 4294901760
    %v179 = vsub.f32 %v177, %v178
    %v180 = vand.u32 %v179, 4294901760
    %181 = vmatpush1.msra.mxu0 %v180
    %182 = vmatprep.subr.mxu0 0.0
    %v183 = vand.u32 %v35, 4294901760
    %v184 = vsub.f32 %v35, %v183
    %v185 = vand.u32 %v184, 4294901760
    %v186 = vsub.f32 %v184, %v185
    %v187 = vand.u32 %v186, 4294901760
    %188 = vmatpush1.msra.mxu0 %v187
    %189 = vmatprep.subr.mxu0 0.0
    %v190 = vand.u32 %v34, 4294901760
    %v191 = vsub.f32 %v34, %v190
    %v192 = vand.u32 %v191, 4294901760
    %v193 = vsub.f32 %v191, %v192
    %v194 = vand.u32 %v193, 4294901760
    %195 = vmatpush1.msra.mxu0 %v194
    %196 = vmatprep.subr.mxu0 0.0
    %v197 = vand.u32 %v33, 4294901760
    %v198 = vsub.f32 %v33, %v197
    %v199 = vand.u32 %v198, 4294901760
    %v200 = vsub.f32 %v198, %v199
    %v201 = vand.u32 %v200, 4294901760
    %202 = vmatpush1.msra.mxu0 %v201
    %203 = vmatprep.subr.mxu0 0.0
    %v204 = vand.u32 %v32, 4294901760
    %v205 = vsub.f32 %v32, %v204
    %v206 = vand.u32 %v205, 4294901760
    %v207 = vsub.f32 %v205, %v206
    %v208 = vand.u32 %v207, 4294901760
    %209 = vmatpush1.msra.mxu0 %v208
    %210 = vmatprep.subr.mxu0 0.0
    %v211 = vand.u32 %v31, 4294901760
    %v212 = vsub.f32 %v31, %v211
    %v213 = vand.u32 %v212, 4294901760
    %v214 = vsub.f32 %v212, %v213
    %v215 = vand.u32 %v214, 4294901760
    %216 = vmatpush1.msra.mxu0 %v215
    %217 = vmatprep.subr.mxu0 0.0
    %v218 = vand.u32 %v30, 4294901760
    %v219 = vsub.f32 %v30, %v218
    %v220 = vand.u32 %v219, 4294901760
    %v221 = vsub.f32 %v219, %v220
    %v222 = vand.u32 %v221, 4294901760
    %223 = vmatpush1.msra.mxu0 %v222
    %224 = vmatprep.subr.mxu0 0.0
    %v225 = vand.u32 %v29, 4294901760
    %v226 = vsub.f32 %v29, %v225
    %v227 = vand.u32 %v226, 4294901760
    %v228 = vsub.f32 %v226, %v227
    %v229 = vand.u32 %v228, 4294901760
    %230 = vmatpush1.msra.mxu0 %v229
    %231 = vmatprep.subr.mxu0 0.0
    %v232 = vand.u32 %v28, 4294901760
    %v233 = vsub.f32 %v28, %v232
    %v234 = vand.u32 %v233, 4294901760
    %v235 = vsub.f32 %v233, %v234
    %v236 = vand.u32 %v235, 4294901760
    %237 = vmatpush1.msra.mxu0 %v236
    %238 = vmatprep.subr.mxu0 0.0
    %v239 = vand.u32 %v27, 4294901760
    %v240 = vsub.f32 %v27, %v239
    %v241 = vand.u32 %v240, 4294901760
    %v242 = vsub.f32 %v240, %v241
    %v243 = vand.u32 %v242, 4294901760
    %244 = vmatpush1.msra.mxu0 %v243
    %245 = vmatprep.subr.mxu0 0.0
    %v246 = vand.u32 %v26, 4294901760
    %v247 = vsub.f32 %v26, %v246
    %v248 = vand.u32 %v247, 4294901760
    %v249 = vsub.f32 %v247, %v248
    %v250 = vand.u32 %v249, 4294901760
    %251 = vmatpush1.msra.mxu0 %v250
    %252 = vmatprep.subr.mxu0 0.0
    %v253 = vand.u32 %v25, 4294901760
    %v254 = vsub.f32 %v25, %v253
    %v255 = vand.u32 %v254, 4294901760
    %v256 = vsub.f32 %v254, %v255
    %v257 = vand.u32 %v256, 4294901760
    %258 = vmatpush1.msra.mxu0 %v257
    %259 = vmatprep.subr.mxu0 0.0
    %v260 = vand.u32 %v24, 4294901760
    %v261 = vsub.f32 %v24, %v260
    %v262 = vand.u32 %v261, 4294901760
    %v263 = vsub.f32 %v261, %v262
    %v264 = vand.u32 %v263, 4294901760
    %265 = vmatpush1.msra.mxu0 %v264
    %266 = vmatprep.subr.mxu0 0.0
    %v267 = vand.u32 %v23, 4294901760
    %v268 = vsub.f32 %v23, %v267
    %v269 = vand.u32 %v268, 4294901760
    %v270 = vsub.f32 %v268, %v269
    %v271 = vand.u32 %v270, 4294901760
    %272 = vmatpush1.msra.mxu0 %v271
    %273 = vmatprep.subr.mxu0 0.0
    %274 = vmatpush2.msra.mxu0 0.0
    %275 = vmatprep.subr.mxu0 0.0
    %276 = vmatpush2.msra.mxu0 0.0
    %277 = vmatprep.subr.mxu0 0.0
    %278 = vmatpush2.msra.mxu0 0.0
    %279 = vmatprep.subr.mxu0 0.0
    %280 = vmatpush2.msra.mxu0 0.0
    %281 = vmatprep.subr.mxu0 0.0
    %282 = vmatpush2.msra.mxu0 0.0
    %283 = vmatprep.subr.mxu0 0.0
    %284 = vmatpush2.msra.mxu0 0.0
    %285 = vmatprep.subr.mxu0 0.0
    %286 = vmatpush2.msra.mxu0 0.0
    %287 = vmatprep.subr.mxu0 0.0
    %288 = vmatpush2.msra.mxu0 0.0
    %289 = vmatprep.subr.mxu0 0.0
    %290 = vmatpush2.msra.mxu0 0.0
    %291 = vmatprep.subr.mxu0 0.0
    %292 = vmatpush2.msra.mxu0 0.0
    %293 = vmatprep.subr.mxu0 0.0
    %294 = vmatpush2.msra.mxu0 0.0
    %295 = vmatprep.subr.mxu0 0.0
    %296 = vmatpush2.msra.mxu0 0.0
    %297 = vmatprep.subr.mxu0 0.0
    %298 = vmatpush2.msra.mxu0 0.0
    %299 = vmatprep.subr.mxu0 0.0
    %300 = vmatpush2.msra.mxu0 0.0
    %301 = vmatprep.subr.mxu0 0.0
    %302 = vmatpush2.msra.mxu0 0.0
    %303 = vmatprep.subr.mxu0 0.0
    %304 = vmatpush2.msra.mxu0 0.0
    %305 = vmatprep.mubr.f32.mxu0 0.0
    %v306 = vand.u32 %v18, 4294901760
    %307 = vmatmul.mubr.f32.gmra.mxu0 %v306
    %v308 = vpop.f32.mrf.mxu0
    %v309 = vadd.f32 %v128, %v308
    %v310 = vpop.f32.mrf.mxu0
    %311 = vmatprep.mubr.f32.mxu0 0.0
    %v312 = vand.u32 %v19, 4294901760
    %313 = vmatmul.mubr.f32.gmra.mxu0 %v312
    %v314 = vpop.f32.mrf.mxu0
    %v315 = vadd.f32 %v138, %v314
    %v316 = vpop.f32.mrf.mxu0
    %317 = vmatprep.mubr.f32.mxu0 0.0
    %v318 = vand.u32 %v20, 4294901760
    %319 = vmatmul.mubr.f32.gmra.mxu0 %v318
    %v320 = vpop.f32.mrf.mxu0
    %v321 = vadd.f32 %v148, %v320
    %v322 = vpop.f32.mrf.mxu0
    %323 = vmatprep.mubr.f32.mxu0 0.0
    %v324 = vand.u32 %v21, 4294901760
    %325 = vmatmul.mubr.f32.gmra.mxu0 %v324
    %v326 = vpop.f32.mrf.mxu0
    %v327 = vadd.f32 %v158, %v326
    %v328 = vpop.f32.mrf.mxu0
    %329 = vdwg.mxu0
    %330 = vmatprep.subr.mxu0 0.0
    %v331 = vand.u32 %v38, 4294901760
    %v332 = vsub.f32 %v38, %v331
    %333 = vmatpush1.msra.mxu0 %v332
    %334 = vmatprep.subr.mxu0 0.0
    %v335 = vand.u32 %v37, 4294901760
    %v336 = vsub.f32 %v37, %v335
    %337 = vmatpush1.msra.mxu0 %v336
    %338 = vmatprep.subr.mxu0 0.0
    %v339 = vand.u32 %v36, 4294901760
    %v340 = vsub.f32 %v36, %v339
    %341 = vmatpush1.msra.mxu0 %v340
    %342 = vmatprep.subr.mxu0 0.0
    %v343 = vand.u32 %v35, 4294901760
    %v344 = vsub.f32 %v35, %v343
    %345 = vmatpush1.msra.mxu0 %v344
    %346 = vmatprep.subr.mxu0 0.0
    %v347 = vand.u32 %v34, 4294901760
    %v348 = vsub.f32 %v34, %v347
    %349 = vmatpush1.msra.mxu0 %v348
    %350 = vmatprep.subr.mxu0 0.0
    %v351 = vand.u32 %v33, 4294901760
    %v352 = vsub.f32 %v33, %v351
    %353 = vmatpush1.msra.mxu0 %v352
    %354 = vmatprep.subr.mxu0 0.0
    %v355 = vand.u32 %v32, 4294901760
    %v356 = vsub.f32 %v32, %v355
    %357 = vmatpush1.msra.mxu0 %v356
    %358 = vmatprep.subr.mxu0 0.0
    %v359 = vand.u32 %v31, 4294901760
    %v360 = vsub.f32 %v31, %v359
    %361 = vmatpush1.msra.mxu0 %v360
    %362 = vmatprep.subr.mxu0 0.0
    %v363 = vand.u32 %v30, 4294901760
    %v364 = vsub.f32 %v30, %v363
    %365 = vmatpush1.msra.mxu0 %v364
    %366 = vmatprep.subr.mxu0 0.0
    %v367 = vand.u32 %v29, 4294901760
    %v368 = vsub.f32 %v29, %v367
    %369 = vmatpush1.msra.mxu0 %v368
    %370 = vmatprep.subr.mxu0 0.0
    %v371 = vand.u32 %v28, 4294901760
    %v372 = vsub.f32 %v28, %v371
    %373 = vmatpush1.msra.mxu0 %v372
    %374 = vmatprep.subr.mxu0 0.0
    %v375 = vand.u32 %v27, 4294901760
    %v376 = vsub.f32 %v27, %v375
    %377 = vmatpush1.msra.mxu0 %v376
    %378 = vmatprep.subr.mxu0 0.0
    %v379 = vand.u32 %v26, 4294901760
    %v380 = vsub.f32 %v26, %v379
    %381 = vmatpush1.msra.mxu0 %v380
    %382 = vmatprep.subr.mxu0 0.0
    %v383 = vand.u32 %v25, 4294901760
    %v384 = vsub.f32 %v25, %v383
    %385 = vmatpush1.msra.mxu0 %v384
    %386 = vmatprep.subr.mxu0 0.0
    %v387 = vand.u32 %v24, 4294901760
    %v388 = vsub.f32 %v24, %v387
    %389 = vmatpush1.msra.mxu0 %v388
    %390 = vmatprep.subr.mxu0 0.0
    %v391 = vand.u32 %v23, 4294901760
    %v392 = vsub.f32 %v23, %v391
    %393 = vmatpush1.msra.mxu0 %v392
    %394 = vmatprep.subr.mxu0 0.0
    %395 = vmatpush2.msra.mxu0 0.0
    %396 = vmatprep.subr.mxu0 0.0
    %397 = vmatpush2.msra.mxu0 0.0
    %398 = vmatprep.subr.mxu0 0.0
    %399 = vmatpush2.msra.mxu0 0.0
    %400 = vmatprep.subr.mxu0 0.0
    %401 = vmatpush2.msra.mxu0 0.0
    %402 = vmatprep.subr.mxu0 0.0
    %403 = vmatpush2.msra.mxu0 0.0
    %404 = vmatprep.subr.mxu0 0.0
    %405 = vmatpush2.msra.mxu0 0.0
    %406 = vmatprep.subr.mxu0 0.0
    %407 = vmatpush2.msra.mxu0 0.0
    %408 = vmatprep.subr.mxu0 0.0
    %409 = vmatpush2.msra.mxu0 0.0
    %410 = vmatprep.subr.mxu0 0.0
    %411 = vmatpush2.msra.mxu0 0.0
    %412 = vmatprep.subr.mxu0 0.0
    %413 = vmatpush2.msra.mxu0 0.0
    %414 = vmatprep.subr.mxu0 0.0
    %415 = vmatpush2.msra.mxu0 0.0
    %416 = vmatprep.subr.mxu0 0.0
    %417 = vmatpush2.msra.mxu0 0.0
    %418 = vmatprep.subr.mxu0 0.0
    %419 = vmatpush2.msra.mxu0 0.0
    %420 = vmatprep.subr.mxu0 0.0
    %421 = vmatpush2.msra.mxu0 0.0
    %422 = vmatprep.subr.mxu0 0.0
    %423 = vmatpush2.msra.mxu0 0.0
    %424 = vmatprep.subr.mxu0 0.0
    %425 = vmatpush2.msra.mxu0 0.0
    %426 = vmatprep.mubr.f32.mxu0 0.0
    %v427 = vand.u32 %v18, 4294901760
    %v428 = vsub.f32 %v18, %v427
    %429 = vmatmul.mubr.f32.gmra.mxu0 %v428
    %v430 = vpop.f32.mrf.mxu0
    %v431 = vadd.f32 %v309, %v430
    %v432 = vpop.f32.mrf.mxu0
    %433 = vmatprep.mubr.f32.mxu0 0.0
    %v434 = vand.u32 %v19, 4294901760
    %v435 = vsub.f32 %v19, %v434
    %436 = vmatmul.mubr.f32.gmra.mxu0 %v435
    %v437 = vpop.f32.mrf.mxu0
    %v438 = vadd.f32 %v315, %v437
    %v439 = vpop.f32.mrf.mxu0
    %440 = vmatprep.mubr.f32.mxu0 0.0
    %v441 = vand.u32 %v20, 4294901760
    %v442 = vsub.f32 %v20, %v441
    %443 = vmatmul.mubr.f32.gmra.mxu0 %v442
    %v444 = vpop.f32.mrf.mxu0
    %v445 = vadd.f32 %v321, %v444
    %v446 = vpop.f32.mrf.mxu0
    %447 = vmatprep.mubr.f32.mxu0 0.0
    %v448 = vand.u32 %v21, 4294901760
    %v449 = vsub.f32 %v21, %v448
    %450 = vmatmul.mubr.f32.gmra.mxu0 %v449
    %v451 = vpop.f32.mrf.mxu0
    %v452 = vadd.f32 %v327, %v451
    %v453 = vpop.f32.mrf.mxu0
    %454 = vdwg.mxu0
    %455 = vmatprep.subr.mxu0 0.0
    %v456 = vand.u32 %v38, 4294901760
    %457 = vmatpush1.msra.mxu0 %v456
    %458 = vmatprep.subr.mxu0 0.0
    %v459 = vand.u32 %v37, 4294901760
    %460 = vmatpush1.msra.mxu0 %v459
    %461 = vmatprep.subr.mxu0 0.0
    %v462 = vand.u32 %v36, 4294901760
    %463 = vmatpush1.msra.mxu0 %v462
    %464 = vmatprep.subr.mxu0 0.0
    %v465 = vand.u32 %v35, 4294901760
    %466 = vmatpush1.msra.mxu0 %v465
    %467 = vmatprep.subr.mxu0 0.0
    %v468 = vand.u32 %v34, 4294901760
    %469 = vmatpush1.msra.mxu0 %v468
    %470 = vmatprep.subr.mxu0 0.0
    %v471 = vand.u32 %v33, 4294901760
    %472 = vmatpush1.msra.mxu0 %v471
    %473 = vmatprep.subr.mxu0 0.0
    %v474 = vand.u32 %v32, 4294901760
    %475 = vmatpush1.msra.mxu0 %v474
    %476 = vmatprep.subr.mxu0 0.0
    %v477 = vand.u32 %v31, 4294901760
    %478 = vmatpush1.msra.mxu0 %v477
    %479 = vmatprep.subr.mxu0 0.0
    %v480 = vand.u32 %v30, 4294901760
    %481 = vmatpush1.msra.mxu0 %v480
    %482 = vmatprep.subr.mxu0 0.0
    %v483 = vand.u32 %v29, 4294901760
    %484 = vmatpush1.msra.mxu0 %v483
    %485 = vmatprep.subr.mxu0 0.0
    %v486 = vand.u32 %v28, 4294901760
    %487 = vmatpush1.msra.mxu0 %v486
    %488 = vmatprep.subr.mxu0 0.0
    %v489 = vand.u32 %v27, 4294901760
    %490 = vmatpush1.msra.mxu0 %v489
    %491 = vmatprep.subr.mxu0 0.0
    %v492 = vand.u32 %v26, 4294901760
    %493 = vmatpush1.msra.mxu0 %v492
    %494 = vmatprep.subr.mxu0 0.0
    %v495 = vand.u32 %v25, 4294901760
    %496 = vmatpush1.msra.mxu0 %v495
    %497 = vmatprep.subr.mxu0 0.0
    %v498 = vand.u32 %v24, 4294901760
    %499 = vmatpush1.msra.mxu0 %v498
    %500 = vmatprep.subr.mxu0 0.0
    %v501 = vand.u32 %v23, 4294901760
    %502 = vmatpush1.msra.mxu0 %v501
    %503 = vmatprep.subr.mxu0 0.0
    %504 = vmatpush2.msra.mxu0 0.0
    %505 = vmatprep.subr.mxu0 0.0
    %506 = vmatpush2.msra.mxu0 0.0
    %507 = vmatprep.subr.mxu0 0.0
    %508 = vmatpush2.msra.mxu0 0.0
    %509 = vmatprep.subr.mxu0 0.0
    %510 = vmatpush2.msra.mxu0 0.0
    %511 = vmatprep.subr.mxu0 0.0
    %512 = vmatpush2.msra.mxu0 0.0
    %513 = vmatprep.subr.mxu0 0.0
    %514 = vmatpush2.msra.mxu0 0.0
    %515 = vmatprep.subr.mxu0 0.0
    %516 = vmatpush2.msra.mxu0 0.0
    %517 = vmatprep.subr.mxu0 0.0
    %518 = vmatpush2.msra.mxu0 0.0
    %519 = vmatprep.subr.mxu0 0.0
    %520 = vmatpush2.msra.mxu0 0.0
    %521 = vmatprep.subr.mxu0 0.0
    %522 = vmatpush2.msra.mxu0 0.0
    %523 = vmatprep.subr.mxu0 0.0
    %524 = vmatpush2.msra.mxu0 0.0
    %525 = vmatprep.subr.mxu0 0.0
    %526 = vmatpush2.msra.mxu0 0.0
    %527 = vmatprep.subr.mxu0 0.0
    %528 = vmatpush2.msra.mxu0 0.0
    %529 = vmatprep.subr.mxu0 0.0
    %530 = vmatpush2.msra.mxu0 0.0
    %531 = vmatprep.subr.mxu0 0.0
    %532 = vmatpush2.msra.mxu0 0.0
    %533 = vmatprep.subr.mxu0 0.0
    %534 = vmatpush2.msra.mxu0 0.0
    %535 = vmatprep.mubr.f32.mxu0 0.0
    %v536 = vand.u32 %v18, 4294901760
    %v537 = vsub.f32 %v18, %v536
    %v538 = vand.u32 %v537, 4294901760
    %539 = vmatmul.mubr.f32.gmra.mxu0 %v538
    %v540 = vpop.f32.mrf.mxu0
    %v541 = vadd.f32 %v431, %v540
    %v542 = vpop.f32.mrf.mxu0
    %543 = vmatprep.mubr.f32.mxu0 0.0
    %v544 = vand.u32 %v19, 4294901760
    %v545 = vsub.f32 %v19, %v544
    %v546 = vand.u32 %v545, 4294901760
    %547 = vmatmul.mubr.f32.gmra.mxu0 %v546
    %v548 = vpop.f32.mrf.mxu0
    %v549 = vadd.f32 %v438, %v548
    %v550 = vpop.f32.mrf.mxu0
    %551 = vmatprep.mubr.f32.mxu0 0.0
    %v552 = vand.u32 %v20, 4294901760
    %v553 = vsub.f32 %v20, %v552
    %v554 = vand.u32 %v553, 4294901760
    %555 = vmatmul.mubr.f32.gmra.mxu0 %v554
    %v556 = vpop.f32.mrf.mxu0
    %v557 = vadd.f32 %v445, %v556
    %v558 = vpop.f32.mrf.mxu0
    %559 = vmatprep.mubr.f32.mxu0 0.0
    %v560 = vand.u32 %v21, 4294901760
    %v561 = vsub.f32 %v21, %v560
    %v562 = vand.u32 %v561, 4294901760
    %563 = vmatmul.mubr.f32.gmra.mxu0 %v562
    %v564 = vpop.f32.mrf.mxu0
    %v565 = vadd.f32 %v452, %v564
    %v566 = vpop.f32.mrf.mxu0
    %567 = vdwg.mxu0
    %568 = vmatprep.subr.mxu0 0.0
    %v569 = vand.u32 %v38, 4294901760
    %v570 = vsub.f32 %v38, %v569
    %v571 = vand.u32 %v570, 4294901760
    %572 = vmatpush1.msra.mxu0 %v571
    %573 = vmatprep.subr.mxu0 0.0
    %v574 = vand.u32 %v37, 4294901760
    %v575 = vsub.f32 %v37, %v574
    %v576 = vand.u32 %v575, 4294901760
    %577 = vmatpush1.msra.mxu0 %v576
    %578 = vmatprep.subr.mxu0 0.0
    %v579 = vand.u32 %v36, 4294901760
    %v580 = vsub.f32 %v36, %v579
    %v581 = vand.u32 %v580, 4294901760
    %582 = vmatpush1.msra.mxu0 %v581
    %583 = vmatprep.subr.mxu0 0.0
    %v584 = vand.u32 %v35, 4294901760
    %v585 = vsub.f32 %v35, %v584
    %v586 = vand.u32 %v585, 4294901760
    %587 = vmatpush1.msra.mxu0 %v586
    %588 = vmatprep.subr.mxu0 0.0
    %v589 = vand.u32 %v34, 4294901760
    %v590 = vsub.f32 %v34, %v589
    %v591 = vand.u32 %v590, 4294901760
    %592 = vmatpush1.msra.mxu0 %v591
    %593 = vmatprep.subr.mxu0 0.0
    %v594 = vand.u32 %v33, 4294901760
    %v595 = vsub.f32 %v33, %v594
    %v596 = vand.u32 %v595, 4294901760
    %597 = vmatpush1.msra.mxu0 %v596
    %598 = vmatprep.subr.mxu0 0.0
    %v599 = vand.u32 %v32, 4294901760
    %v600 = vsub.f32 %v32, %v599
    %v601 = vand.u32 %v600, 4294901760
    %602 = vmatpush1.msra.mxu0 %v601
    %603 = vmatprep.subr.mxu0 0.0
    %v604 = vand.u32 %v31, 4294901760
    %v605 = vsub.f32 %v31, %v604
    %v606 = vand.u32 %v605, 4294901760
    %607 = vmatpush1.msra.mxu0 %v606
    %608 = vmatprep.subr.mxu0 0.0
    %v609 = vand.u32 %v30, 4294901760
    %v610 = vsub.f32 %v30, %v609
    %v611 = vand.u32 %v610, 4294901760
    %612 = vmatpush1.msra.mxu0 %v611
    %613 = vmatprep.subr.mxu0 0.0
    %v614 = vand.u32 %v29, 4294901760
    %v615 = vsub.f32 %v29, %v614
    %v616 = vand.u32 %v615, 4294901760
    %617 = vmatpush1.msra.mxu0 %v616
    %618 = vmatprep.subr.mxu0 0.0
    %v619 = vand.u32 %v28, 4294901760
    %v620 = vsub.f32 %v28, %v619
    %v621 = vand.u32 %v620, 4294901760
    %622 = vmatpush1.msra.mxu0 %v621
    %623 = vmatprep.subr.mxu0 0.0
    %v624 = vand.u32 %v27, 4294901760
    %v625 = vsub.f32 %v27, %v624
    %v626 = vand.u32 %v625, 4294901760
    %627 = vmatpush1.msra.mxu0 %v626
    %628 = vmatprep.subr.mxu0 0.0
    %v629 = vand.u32 %v26, 4294901760
    %v630 = vsub.f32 %v26, %v629
    %v631 = vand.u32 %v630, 4294901760
    %632 = vmatpush1.msra.mxu0 %v631
    %633 = vmatprep.subr.mxu0 0.0
    %v634 = vand.u32 %v25, 4294901760
    %v635 = vsub.f32 %v25, %v634
    %v636 = vand.u32 %v635, 4294901760
    %637 = vmatpush1.msra.mxu0 %v636
    %638 = vmatprep.subr.mxu0 0.0
    %v639 = vand.u32 %v24, 4294901760
    %v640 = vsub.f32 %v24, %v639
    %v641 = vand.u32 %v640, 4294901760
    %642 = vmatpush1.msra.mxu0 %v641
    %643 = vmatprep.subr.mxu0 0.0
    %v644 = vand.u32 %v23, 4294901760
    %v645 = vsub.f32 %v23, %v644
    %v646 = vand.u32 %v645, 4294901760
    %647 = vmatpush1.msra.mxu0 %v646
    %648 = vmatprep.subr.mxu0 0.0
    %649 = vmatpush2.msra.mxu0 0.0
    %650 = vmatprep.subr.mxu0 0.0
    %651 = vmatpush2.msra.mxu0 0.0
    %652 = vmatprep.subr.mxu0 0.0
    %653 = vmatpush2.msra.mxu0 0.0
    %654 = vmatprep.subr.mxu0 0.0
    %655 = vmatpush2.msra.mxu0 0.0
    %656 = vmatprep.subr.mxu0 0.0
    %657 = vmatpush2.msra.mxu0 0.0
    %658 = vmatprep.subr.mxu0 0.0
    %659 = vmatpush2.msra.mxu0 0.0
    %660 = vmatprep.subr.mxu0 0.0
    %661 = vmatpush2.msra.mxu0 0.0
    %662 = vmatprep.subr.mxu0 0.0
    %663 = vmatpush2.msra.mxu0 0.0
    %664 = vmatprep.subr.mxu0 0.0
    %665 = vmatpush2.msra.mxu0 0.0
    %666 = vmatprep.subr.mxu0 0.0
    %667 = vmatpush2.msra.mxu0 0.0
    %668 = vmatprep.subr.mxu0 0.0
    %669 = vmatpush2.msra.mxu0 0.0
    %670 = vmatprep.subr.mxu0 0.0
    %671 = vmatpush2.msra.mxu0 0.0
    %672 = vmatprep.subr.mxu0 0.0
    %673 = vmatpush2.msra.mxu0 0.0
    %674 = vmatprep.subr.mxu0 0.0
    %675 = vmatpush2.msra.mxu0 0.0
    %676 = vmatprep.subr.mxu0 0.0
    %677 = vmatpush2.msra.mxu0 0.0
    %678 = vmatprep.subr.mxu0 0.0
    %679 = vmatpush2.msra.mxu0 0.0
    %680 = vmatprep.mubr.f32.mxu0 0.0
    %v681 = vand.u32 %v18, 4294901760
    %682 = vmatmul.mubr.f32.gmra.mxu0 %v681
    %v683 = vpop.f32.mrf.mxu0
    %v684 = vadd.f32 %v541, %v683
    %v685 = vpop.f32.mrf.mxu0
    %686 = vmatprep.mubr.f32.mxu0 0.0
    %v687 = vand.u32 %v19, 4294901760
    %688 = vmatmul.mubr.f32.gmra.mxu0 %v687
    %v689 = vpop.f32.mrf.mxu0
    %v690 = vadd.f32 %v549, %v689
    %v691 = vpop.f32.mrf.mxu0
    %692 = vmatprep.mubr.f32.mxu0 0.0
    %v693 = vand.u32 %v20, 4294901760
    %694 = vmatmul.mubr.f32.gmra.mxu0 %v693
    %v695 = vpop.f32.mrf.mxu0
    %v696 = vadd.f32 %v557, %v695
    %v697 = vpop.f32.mrf.mxu0
    %698 = vmatprep.mubr.f32.mxu0 0.0
    %v699 = vand.u32 %v21, 4294901760
    %700 = vmatmul.mubr.f32.gmra.mxu0 %v699
    %v701 = vpop.f32.mrf.mxu0
    %v702 = vadd.f32 %v565, %v701
    %v703 = vpop.f32.mrf.mxu0
    %704 = vdwg.mxu0
    %705 = vmatprep.subr.mxu0 0.0
    %v706 = vand.u32 %v38, 4294901760
    %707 = vmatpush1.msra.mxu0 %v706
    %708 = vmatprep.subr.mxu0 0.0
    %v709 = vand.u32 %v37, 4294901760
    %710 = vmatpush1.msra.mxu0 %v709
    %711 = vmatprep.subr.mxu0 0.0
    %v712 = vand.u32 %v36, 4294901760
    %713 = vmatpush1.msra.mxu0 %v712
    %714 = vmatprep.subr.mxu0 0.0
    %v715 = vand.u32 %v35, 4294901760
    %716 = vmatpush1.msra.mxu0 %v715
    %717 = vmatprep.subr.mxu0 0.0
    %v718 = vand.u32 %v34, 4294901760
    %719 = vmatpush1.msra.mxu0 %v718
    %720 = vmatprep.subr.mxu0 0.0
    %v721 = vand.u32 %v33, 4294901760
    %722 = vmatpush1.msra.mxu0 %v721
    %723 = vmatprep.subr.mxu0 0.0
    %v724 = vand.u32 %v32, 4294901760
    %725 = vmatpush1.msra.mxu0 %v724
    %726 = vmatprep.subr.mxu0 0.0
    %v727 = vand.u32 %v31, 4294901760
    %728 = vmatpush1.msra.mxu0 %v727
    %729 = vmatprep.subr.mxu0 0.0
    %v730 = vand.u32 %v30, 4294901760
    %731 = vmatpush1.msra.mxu0 %v730
    %732 = vmatprep.subr.mxu0 0.0
    %v733 = vand.u32 %v29, 4294901760
    %734 = vmatpush1.msra.mxu0 %v733
    %735 = vmatprep.subr.mxu0 0.0
    %v736 = vand.u32 %v28, 4294901760
    %737 = vmatpush1.msra.mxu0 %v736
    %738 = vmatprep.subr.mxu0 0.0
    %v739 = vand.u32 %v27, 4294901760
    %740 = vmatpush1.msra.mxu0 %v739
    %741 = vmatprep.subr.mxu0 0.0
    %v742 = vand.u32 %v26, 4294901760
    %743 = vmatpush1.msra.mxu0 %v742
    %744 = vmatprep.subr.mxu0 0.0
    %v745 = vand.u32 %v25, 4294901760
    %746 = vmatpush1.msra.mxu0 %v745
    %747 = vmatprep.subr.mxu0 0.0
    %v748 = vand.u32 %v24, 4294901760
    %749 = vmatpush1.msra.mxu0 %v748
    %750 = vmatprep.subr.mxu0 0.0
    %v751 = vand.u32 %v23, 4294901760
    %752 = vmatpush1.msra.mxu0 %v751
    %753 = vmatprep.subr.mxu0 0.0
    %754 = vmatpush2.msra.mxu0 0.0
    %755 = vmatprep.subr.mxu0 0.0
    %756 = vmatpush2.msra.mxu0 0.0
    %757 = vmatprep.subr.mxu0 0.0
    %758 = vmatpush2.msra.mxu0 0.0
    %759 = vmatprep.subr.mxu0 0.0
    %760 = vmatpush2.msra.mxu0 0.0
    %761 = vmatprep.subr.mxu0 0.0
    %762 = vmatpush2.msra.mxu0 0.0
    %763 = vmatprep.subr.mxu0 0.0
    %764 = vmatpush2.msra.mxu0 0.0
    %765 = vmatprep.subr.mxu0 0.0
    %766 = vmatpush2.msra.mxu0 0.0
    %767 = vmatprep.subr.mxu0 0.0
    %768 = vmatpush2.msra.mxu0 0.0
    %769 = vmatprep.subr.mxu0 0.0
    %770 = vmatpush2.msra.mxu0 0.0
    %771 = vmatprep.subr.mxu0 0.0
    %772 = vmatpush2.msra.mxu0 0.0
    %773 = vmatprep.subr.mxu0 0.0
    %774 = vmatpush2.msra.mxu0 0.0
    %775 = vmatprep.subr.mxu0 0.0
    %776 = vmatpush2.msra.mxu0 0.0
    %777 = vmatprep.subr.mxu0 0.0
    %778 = vmatpush2.msra.mxu0 0.0
    %779 = vmatprep.subr.mxu0 0.0
    %780 = vmatpush2.msra.mxu0 0.0
    %781 = vmatprep.subr.mxu0 0.0
    %782 = vmatpush2.msra.mxu0 0.0
    %783 = vmatprep.subr.mxu0 0.0
    %784 = vmatpush2.msra.mxu0 0.0
    %785 = vmatprep.mubr.f32.mxu0 0.0
    %v786 = vand.u32 %v18, 4294901760
    %787 = vmatmul.mubr.f32.gmra.mxu0 %v786
    %v788 = vpop.f32.mrf.mxu0
    %v789 = vadd.f32 %v684, %v788
    %v790 = vpop.f32.mrf.mxu0
    %791 = vmatprep.mubr.f32.mxu0 0.0
    %v792 = vand.u32 %v19, 4294901760
    %793 = vmatmul.mubr.f32.gmra.mxu0 %v792
    %v794 = vpop.f32.mrf.mxu0
    %v795 = vadd.f32 %v690, %v794
    %v796 = vpop.f32.mrf.mxu0
    %797 = vmatprep.mubr.f32.mxu0 0.0
    %v798 = vand.u32 %v20, 4294901760
    %799 = vmatmul.mubr.f32.gmra.mxu0 %v798
    %v800 = vpop.f32.mrf.mxu0
    %v801 = vadd.f32 %v696, %v800
    %v802 = vpop.f32.mrf.mxu0
    %803 = vmatprep.mubr.f32.mxu0 0.0
    %v804 = vand.u32 %v21, 4294901760
    %805 = vmatmul.mubr.f32.gmra.mxu0 %v804
    %v806 = vpop.f32.mrf.mxu0
    %v807 = vadd.f32 %v702, %v806
    %v808 = vpop.f32.mrf.mxu0
    %809 = vdwg.mxu0
    %v810 = vmul.f32 %v789, 0.03125
    %v811 = vmul.f32 %v795, 0.03125
    %v812 = vmul.f32 %v801, 0.03125
    %v813 = vmul.f32 %v807, 0.03125
    %vm814 = vcmask 31744
    %v816 = vsel %vm814, %v810, 0
    %v819 = vsel %vm814, %v811, 0
    %v822 = vsel %vm814, %v812, 0
    %v825 = vsel %vm814, %v813, 0
    %vm827 = vcmask 1043456
    %v829 = vsel %vm827, %v39, 0
    %831 = vmatprep.subr.mxu0 0.0
    %832 = vmatpush1.msra.mxu0 0.0
    %833 = vmatprep.subr.mxu0 0.0
    %834 = vmatpush1.msra.mxu0 0.0
    %835 = vmatprep.subr.mxu0 0.0
    %836 = vmatpush1.msra.mxu0 0.0
    %837 = vmatprep.subr.mxu0 0.0
    %838 = vmatpush1.msra.mxu0 0.0
    %839 = vmatprep.subr.mxu0 0.0
    %840 = vmatpush1.msra.mxu0 0.0
    %841 = vmatprep.subr.mxu0 0.0
    %842 = vmatpush1.msra.mxu0 0.0
    %843 = vmatprep.subr.mxu0 0.0
    %844 = vmatpush1.msra.mxu0 0.0
    %845 = vmatprep.subr.mxu0 0.0
    %846 = vmatpush1.msra.mxu0 0.0
    %847 = vmatprep.subr.mxu0 0.0
    %848 = vmatpush1.msra.mxu0 0.0
    %849 = vmatprep.subr.mxu0 0.0
    %850 = vmatpush1.msra.mxu0 0.0
    %851 = vmatprep.subr.mxu0 0.0
    %852 = vmatpush1.msra.mxu0 0.0
    %853 = vmatprep.subr.mxu0 0.0
    %854 = vmatpush1.msra.mxu0 0.0
    %855 = vmatprep.subr.mxu0 0.0
    %856 = vmatpush1.msra.mxu0 0.0
    %857 = vmatprep.subr.mxu0 0.0
    %858 = vmatpush1.msra.mxu0 0.0
    %859 = vmatprep.subr.mxu0 0.0
    %860 = vmatpush1.msra.mxu0 0.0
    %861 = vmatprep.subr.mxu0 0.0
    %v862 = vand.u32 %v829, 4294901760
    %863 = vmatpush1.msra.mxu0 %v862
    %864 = vmatprep.subr.mxu0 0.0
    %865 = vmatpush2.msra.mxu0 0.0
    %866 = vmatprep.subr.mxu0 0.0
    %867 = vmatpush2.msra.mxu0 0.0
    %868 = vmatprep.subr.mxu0 0.0
    %869 = vmatpush2.msra.mxu0 0.0
    %870 = vmatprep.subr.mxu0 0.0
    %871 = vmatpush2.msra.mxu0 0.0
    %872 = vmatprep.subr.mxu0 0.0
    %873 = vmatpush2.msra.mxu0 0.0
    %874 = vmatprep.subr.mxu0 0.0
    %875 = vmatpush2.msra.mxu0 0.0
    %876 = vmatprep.subr.mxu0 0.0
    %877 = vmatpush2.msra.mxu0 0.0
    %878 = vmatprep.subr.mxu0 0.0
    %879 = vmatpush2.msra.mxu0 0.0
    %880 = vmatprep.subr.mxu0 0.0
    %881 = vmatpush2.msra.mxu0 0.0
    %882 = vmatprep.subr.mxu0 0.0
    %883 = vmatpush2.msra.mxu0 0.0
    %884 = vmatprep.subr.mxu0 0.0
    %885 = vmatpush2.msra.mxu0 0.0
    %886 = vmatprep.subr.mxu0 0.0
    %887 = vmatpush2.msra.mxu0 0.0
    %888 = vmatprep.subr.mxu0 0.0
    %889 = vmatpush2.msra.mxu0 0.0
    %890 = vmatprep.subr.mxu0 0.0
    %891 = vmatpush2.msra.mxu0 0.0
    %892 = vmatprep.subr.mxu0 0.0
    %893 = vmatpush2.msra.mxu0 0.0
    %894 = vmatprep.subr.mxu0 0.0
    %895 = vmatpush2.msra.mxu0 0.0
    %896 = vmatprep.mubr.f32.mxu0 0.0
    %v897 = vand.u32 %v816, 4294901760
    %v898 = vsub.f32 %v816, %v897
    %v899 = vand.u32 %v898, 4294901760
    %v900 = vsub.f32 %v898, %v899
    %v901 = vand.u32 %v900, 4294901760
    %902 = vmatmul.mubr.f32.gmra.mxu0 %v901
    %v903 = vpop.f32.mrf.mxu0
    %v904 = vadd.f32 0.0, %v903
    %v905 = vpop.f32.mrf.mxu0
    %906 = vmatprep.mubr.f32.mxu0 0.0
    %v907 = vand.u32 %v819, 4294901760
    %v908 = vsub.f32 %v819, %v907
    %v909 = vand.u32 %v908, 4294901760
    %v910 = vsub.f32 %v908, %v909
    %v911 = vand.u32 %v910, 4294901760
    %912 = vmatmul.mubr.f32.gmra.mxu0 %v911
    %v913 = vpop.f32.mrf.mxu0
    %v914 = vadd.f32 0.0, %v913
    %v915 = vpop.f32.mrf.mxu0
    %916 = vmatprep.mubr.f32.mxu0 0.0
    %v917 = vand.u32 %v822, 4294901760
    %v918 = vsub.f32 %v822, %v917
    %v919 = vand.u32 %v918, 4294901760
    %v920 = vsub.f32 %v918, %v919
    %v921 = vand.u32 %v920, 4294901760
    %922 = vmatmul.mubr.f32.gmra.mxu0 %v921
    %v923 = vpop.f32.mrf.mxu0
    %v924 = vadd.f32 0.0, %v923
    %v925 = vpop.f32.mrf.mxu0
    %926 = vmatprep.mubr.f32.mxu0 0.0
    %v927 = vand.u32 %v825, 4294901760
    %v928 = vsub.f32 %v825, %v927
    %v929 = vand.u32 %v928, 4294901760
    %v930 = vsub.f32 %v928, %v929
    %v931 = vand.u32 %v930, 4294901760
    %932 = vmatmul.mubr.f32.gmra.mxu0 %v931
    %v933 = vpop.f32.mrf.mxu0
    %v934 = vadd.f32 0.0, %v933
    %v935 = vpop.f32.mrf.mxu0
    %936 = vdwg.mxu0
    %937 = vmatprep.subr.mxu0 0.0
    %938 = vmatpush1.msra.mxu0 0.0
    %939 = vmatprep.subr.mxu0 0.0
    %940 = vmatpush1.msra.mxu0 0.0
    %941 = vmatprep.subr.mxu0 0.0
    %942 = vmatpush1.msra.mxu0 0.0
    %943 = vmatprep.subr.mxu0 0.0
    %944 = vmatpush1.msra.mxu0 0.0
    %945 = vmatprep.subr.mxu0 0.0
    %946 = vmatpush1.msra.mxu0 0.0
    %947 = vmatprep.subr.mxu0 0.0
    %948 = vmatpush1.msra.mxu0 0.0
    %949 = vmatprep.subr.mxu0 0.0
    %950 = vmatpush1.msra.mxu0 0.0
    %951 = vmatprep.subr.mxu0 0.0
    %952 = vmatpush1.msra.mxu0 0.0
    %953 = vmatprep.subr.mxu0 0.0
    %954 = vmatpush1.msra.mxu0 0.0
    %955 = vmatprep.subr.mxu0 0.0
    %956 = vmatpush1.msra.mxu0 0.0
    %957 = vmatprep.subr.mxu0 0.0
    %958 = vmatpush1.msra.mxu0 0.0
    %959 = vmatprep.subr.mxu0 0.0
    %960 = vmatpush1.msra.mxu0 0.0
    %961 = vmatprep.subr.mxu0 0.0
    %962 = vmatpush1.msra.mxu0 0.0
    %963 = vmatprep.subr.mxu0 0.0
    %964 = vmatpush1.msra.mxu0 0.0
    %965 = vmatprep.subr.mxu0 0.0
    %966 = vmatpush1.msra.mxu0 0.0
    %967 = vmatprep.subr.mxu0 0.0
    %v968 = vand.u32 %v829, 4294901760
    %v969 = vsub.f32 %v829, %v968
    %v970 = vand.u32 %v969, 4294901760
    %v971 = vsub.f32 %v969, %v970
    %v972 = vand.u32 %v971, 4294901760
    %973 = vmatpush1.msra.mxu0 %v972
    %974 = vmatprep.subr.mxu0 0.0
    %975 = vmatpush2.msra.mxu0 0.0
    %976 = vmatprep.subr.mxu0 0.0
    %977 = vmatpush2.msra.mxu0 0.0
    %978 = vmatprep.subr.mxu0 0.0
    %979 = vmatpush2.msra.mxu0 0.0
    %980 = vmatprep.subr.mxu0 0.0
    %981 = vmatpush2.msra.mxu0 0.0
    %982 = vmatprep.subr.mxu0 0.0
    %983 = vmatpush2.msra.mxu0 0.0
    %984 = vmatprep.subr.mxu0 0.0
    %985 = vmatpush2.msra.mxu0 0.0
    %986 = vmatprep.subr.mxu0 0.0
    %987 = vmatpush2.msra.mxu0 0.0
    %988 = vmatprep.subr.mxu0 0.0
    %989 = vmatpush2.msra.mxu0 0.0
    %990 = vmatprep.subr.mxu0 0.0
    %991 = vmatpush2.msra.mxu0 0.0
    %992 = vmatprep.subr.mxu0 0.0
    %993 = vmatpush2.msra.mxu0 0.0
    %994 = vmatprep.subr.mxu0 0.0
    %995 = vmatpush2.msra.mxu0 0.0
    %996 = vmatprep.subr.mxu0 0.0
    %997 = vmatpush2.msra.mxu0 0.0
    %998 = vmatprep.subr.mxu0 0.0
    %999 = vmatpush2.msra.mxu0 0.0
    %1000 = vmatprep.subr.mxu0 0.0
    %1001 = vmatpush2.msra.mxu0 0.0
    %1002 = vmatprep.subr.mxu0 0.0
    %1003 = vmatpush2.msra.mxu0 0.0
    %1004 = vmatprep.subr.mxu0 0.0
    %1005 = vmatpush2.msra.mxu0 0.0
    %1006 = vmatprep.mubr.f32.mxu0 0.0
    %v1007 = vand.u32 %v816, 4294901760
    %1008 = vmatmul.mubr.f32.gmra.mxu0 %v1007
    %v1009 = vpop.f32.mrf.mxu0
    %v1010 = vadd.f32 %v904, %v1009
    %v1011 = vpop.f32.mrf.mxu0
    %1012 = vmatprep.mubr.f32.mxu0 0.0
    %v1013 = vand.u32 %v819, 4294901760
    %1014 = vmatmul.mubr.f32.gmra.mxu0 %v1013
    %v1015 = vpop.f32.mrf.mxu0
    %v1016 = vadd.f32 %v914, %v1015
    %v1017 = vpop.f32.mrf.mxu0
    %1018 = vmatprep.mubr.f32.mxu0 0.0
    %v1019 = vand.u32 %v822, 4294901760
    %1020 = vmatmul.mubr.f32.gmra.mxu0 %v1019
    %v1021 = vpop.f32.mrf.mxu0
    %v1022 = vadd.f32 %v924, %v1021
    %v1023 = vpop.f32.mrf.mxu0
    %1024 = vmatprep.mubr.f32.mxu0 0.0
    %v1025 = vand.u32 %v825, 4294901760
    %1026 = vmatmul.mubr.f32.gmra.mxu0 %v1025
    %v1027 = vpop.f32.mrf.mxu0
    %v1028 = vadd.f32 %v934, %v1027
    %v1029 = vpop.f32.mrf.mxu0
    %1030 = vdwg.mxu0
    %1031 = vmatprep.subr.mxu0 0.0
    %1032 = vmatpush1.msra.mxu0 0.0
    %1033 = vmatprep.subr.mxu0 0.0
    %1034 = vmatpush1.msra.mxu0 0.0
    %1035 = vmatprep.subr.mxu0 0.0
    %1036 = vmatpush1.msra.mxu0 0.0
    %1037 = vmatprep.subr.mxu0 0.0
    %1038 = vmatpush1.msra.mxu0 0.0
    %1039 = vmatprep.subr.mxu0 0.0
    %1040 = vmatpush1.msra.mxu0 0.0
    %1041 = vmatprep.subr.mxu0 0.0
    %1042 = vmatpush1.msra.mxu0 0.0
    %1043 = vmatprep.subr.mxu0 0.0
    %1044 = vmatpush1.msra.mxu0 0.0
    %1045 = vmatprep.subr.mxu0 0.0
    %1046 = vmatpush1.msra.mxu0 0.0
    %1047 = vmatprep.subr.mxu0 0.0
    %1048 = vmatpush1.msra.mxu0 0.0
    %1049 = vmatprep.subr.mxu0 0.0
    %1050 = vmatpush1.msra.mxu0 0.0
    %1051 = vmatprep.subr.mxu0 0.0
    %1052 = vmatpush1.msra.mxu0 0.0
    %1053 = vmatprep.subr.mxu0 0.0
    %1054 = vmatpush1.msra.mxu0 0.0
    %1055 = vmatprep.subr.mxu0 0.0
    %1056 = vmatpush1.msra.mxu0 0.0
    %1057 = vmatprep.subr.mxu0 0.0
    %1058 = vmatpush1.msra.mxu0 0.0
    %1059 = vmatprep.subr.mxu0 0.0
    %1060 = vmatpush1.msra.mxu0 0.0
    %1061 = vmatprep.subr.mxu0 0.0
    %v1062 = vand.u32 %v829, 4294901760
    %v1063 = vsub.f32 %v829, %v1062
    %1064 = vmatpush1.msra.mxu0 %v1063
    %1065 = vmatprep.subr.mxu0 0.0
    %1066 = vmatpush2.msra.mxu0 0.0
    %1067 = vmatprep.subr.mxu0 0.0
    %1068 = vmatpush2.msra.mxu0 0.0
    %1069 = vmatprep.subr.mxu0 0.0
    %1070 = vmatpush2.msra.mxu0 0.0
    %1071 = vmatprep.subr.mxu0 0.0
    %1072 = vmatpush2.msra.mxu0 0.0
    %1073 = vmatprep.subr.mxu0 0.0
    %1074 = vmatpush2.msra.mxu0 0.0
    %1075 = vmatprep.subr.mxu0 0.0
    %1076 = vmatpush2.msra.mxu0 0.0
    %1077 = vmatprep.subr.mxu0 0.0
    %1078 = vmatpush2.msra.mxu0 0.0
    %1079 = vmatprep.subr.mxu0 0.0
    %1080 = vmatpush2.msra.mxu0 0.0
    %1081 = vmatprep.subr.mxu0 0.0
    %1082 = vmatpush2.msra.mxu0 0.0
    %1083 = vmatprep.subr.mxu0 0.0
    %1084 = vmatpush2.msra.mxu0 0.0
    %1085 = vmatprep.subr.mxu0 0.0
    %1086 = vmatpush2.msra.mxu0 0.0
    %1087 = vmatprep.subr.mxu0 0.0
    %1088 = vmatpush2.msra.mxu0 0.0
    %1089 = vmatprep.subr.mxu0 0.0
    %1090 = vmatpush2.msra.mxu0 0.0
    %1091 = vmatprep.subr.mxu0 0.0
    %1092 = vmatpush2.msra.mxu0 0.0
    %1093 = vmatprep.subr.mxu0 0.0
    %1094 = vmatpush2.msra.mxu0 0.0
    %1095 = vmatprep.subr.mxu0 0.0
    %1096 = vmatpush2.msra.mxu0 0.0
    %1097 = vmatprep.mubr.f32.mxu0 0.0
    %v1098 = vand.u32 %v816, 4294901760
    %v1099 = vsub.f32 %v816, %v1098
    %1100 = vmatmul.mubr.f32.gmra.mxu0 %v1099
    %v1101 = vpop.f32.mrf.mxu0
    %v1102 = vadd.f32 %v1010, %v1101
    %v1103 = vpop.f32.mrf.mxu0
    %1104 = vmatprep.mubr.f32.mxu0 0.0
    %v1105 = vand.u32 %v819, 4294901760
    %v1106 = vsub.f32 %v819, %v1105
    %1107 = vmatmul.mubr.f32.gmra.mxu0 %v1106
    %v1108 = vpop.f32.mrf.mxu0
    %v1109 = vadd.f32 %v1016, %v1108
    %v1110 = vpop.f32.mrf.mxu0
    %1111 = vmatprep.mubr.f32.mxu0 0.0
    %v1112 = vand.u32 %v822, 4294901760
    %v1113 = vsub.f32 %v822, %v1112
    %1114 = vmatmul.mubr.f32.gmra.mxu0 %v1113
    %v1115 = vpop.f32.mrf.mxu0
    %v1116 = vadd.f32 %v1022, %v1115
    %v1117 = vpop.f32.mrf.mxu0
    %1118 = vmatprep.mubr.f32.mxu0 0.0
    %v1119 = vand.u32 %v825, 4294901760
    %v1120 = vsub.f32 %v825, %v1119
    %1121 = vmatmul.mubr.f32.gmra.mxu0 %v1120
    %v1122 = vpop.f32.mrf.mxu0
    %v1123 = vadd.f32 %v1028, %v1122
    %v1124 = vpop.f32.mrf.mxu0
    %1125 = vdwg.mxu0
    %1126 = vmatprep.subr.mxu0 0.0
    %1127 = vmatpush1.msra.mxu0 0.0
    %1128 = vmatprep.subr.mxu0 0.0
    %1129 = vmatpush1.msra.mxu0 0.0
    %1130 = vmatprep.subr.mxu0 0.0
    %1131 = vmatpush1.msra.mxu0 0.0
    %1132 = vmatprep.subr.mxu0 0.0
    %1133 = vmatpush1.msra.mxu0 0.0
    %1134 = vmatprep.subr.mxu0 0.0
    %1135 = vmatpush1.msra.mxu0 0.0
    %1136 = vmatprep.subr.mxu0 0.0
    %1137 = vmatpush1.msra.mxu0 0.0
    %1138 = vmatprep.subr.mxu0 0.0
    %1139 = vmatpush1.msra.mxu0 0.0
    %1140 = vmatprep.subr.mxu0 0.0
    %1141 = vmatpush1.msra.mxu0 0.0
    %1142 = vmatprep.subr.mxu0 0.0
    %1143 = vmatpush1.msra.mxu0 0.0
    %1144 = vmatprep.subr.mxu0 0.0
    %1145 = vmatpush1.msra.mxu0 0.0
    %1146 = vmatprep.subr.mxu0 0.0
    %1147 = vmatpush1.msra.mxu0 0.0
    %1148 = vmatprep.subr.mxu0 0.0
    %1149 = vmatpush1.msra.mxu0 0.0
    %1150 = vmatprep.subr.mxu0 0.0
    %1151 = vmatpush1.msra.mxu0 0.0
    %1152 = vmatprep.subr.mxu0 0.0
    %1153 = vmatpush1.msra.mxu0 0.0
    %1154 = vmatprep.subr.mxu0 0.0
    %1155 = vmatpush1.msra.mxu0 0.0
    %1156 = vmatprep.subr.mxu0 0.0
    %v1157 = vand.u32 %v829, 4294901760
    %1158 = vmatpush1.msra.mxu0 %v1157
    %1159 = vmatprep.subr.mxu0 0.0
    %1160 = vmatpush2.msra.mxu0 0.0
    %1161 = vmatprep.subr.mxu0 0.0
    %1162 = vmatpush2.msra.mxu0 0.0
    %1163 = vmatprep.subr.mxu0 0.0
    %1164 = vmatpush2.msra.mxu0 0.0
    %1165 = vmatprep.subr.mxu0 0.0
    %1166 = vmatpush2.msra.mxu0 0.0
    %1167 = vmatprep.subr.mxu0 0.0
    %1168 = vmatpush2.msra.mxu0 0.0
    %1169 = vmatprep.subr.mxu0 0.0
    %1170 = vmatpush2.msra.mxu0 0.0
    %1171 = vmatprep.subr.mxu0 0.0
    %1172 = vmatpush2.msra.mxu0 0.0
    %1173 = vmatprep.subr.mxu0 0.0
    %1174 = vmatpush2.msra.mxu0 0.0
    %1175 = vmatprep.subr.mxu0 0.0
    %1176 = vmatpush2.msra.mxu0 0.0
    %1177 = vmatprep.subr.mxu0 0.0
    %1178 = vmatpush2.msra.mxu0 0.0
    %1179 = vmatprep.subr.mxu0 0.0
    %1180 = vmatpush2.msra.mxu0 0.0
    %1181 = vmatprep.subr.mxu0 0.0
    %1182 = vmatpush2.msra.mxu0 0.0
    %1183 = vmatprep.subr.mxu0 0.0
    %1184 = vmatpush2.msra.mxu0 0.0
    %1185 = vmatprep.subr.mxu0 0.0
    %1186 = vmatpush2.msra.mxu0 0.0
    %1187 = vmatprep.subr.mxu0 0.0
    %1188 = vmatpush2.msra.mxu0 0.0
    %1189 = vmatprep.subr.mxu0 0.0
    %1190 = vmatpush2.msra.mxu0 0.0
    %1191 = vmatprep.mubr.f32.mxu0 0.0
    %v1192 = vand.u32 %v816, 4294901760
    %v1193 = vsub.f32 %v816, %v1192
    %v1194 = vand.u32 %v1193, 4294901760
    %1195 = vmatmul.mubr.f32.gmra.mxu0 %v1194
    %v1196 = vpop.f32.mrf.mxu0
    %v1197 = vadd.f32 %v1102, %v1196
    %v1198 = vpop.f32.mrf.mxu0
    %1199 = vmatprep.mubr.f32.mxu0 0.0
    %v1200 = vand.u32 %v819, 4294901760
    %v1201 = vsub.f32 %v819, %v1200
    %v1202 = vand.u32 %v1201, 4294901760
    %1203 = vmatmul.mubr.f32.gmra.mxu0 %v1202
    %v1204 = vpop.f32.mrf.mxu0
    %v1205 = vadd.f32 %v1109, %v1204
    %v1206 = vpop.f32.mrf.mxu0
    %1207 = vmatprep.mubr.f32.mxu0 0.0
    %v1208 = vand.u32 %v822, 4294901760
    %v1209 = vsub.f32 %v822, %v1208
    %v1210 = vand.u32 %v1209, 4294901760
    %1211 = vmatmul.mubr.f32.gmra.mxu0 %v1210
    %v1212 = vpop.f32.mrf.mxu0
    %v1213 = vadd.f32 %v1116, %v1212
    %v1214 = vpop.f32.mrf.mxu0
    %1215 = vmatprep.mubr.f32.mxu0 0.0
    %v1216 = vand.u32 %v825, 4294901760
    %v1217 = vsub.f32 %v825, %v1216
    %v1218 = vand.u32 %v1217, 4294901760
    %1219 = vmatmul.mubr.f32.gmra.mxu0 %v1218
    %v1220 = vpop.f32.mrf.mxu0
    %v1221 = vadd.f32 %v1123, %v1220
    %v1222 = vpop.f32.mrf.mxu0
    %1223 = vdwg.mxu0
    %1224 = vmatprep.subr.mxu0 0.0
    %1225 = vmatpush1.msra.mxu0 0.0
    %1226 = vmatprep.subr.mxu0 0.0
    %1227 = vmatpush1.msra.mxu0 0.0
    %1228 = vmatprep.subr.mxu0 0.0
    %1229 = vmatpush1.msra.mxu0 0.0
    %1230 = vmatprep.subr.mxu0 0.0
    %1231 = vmatpush1.msra.mxu0 0.0
    %1232 = vmatprep.subr.mxu0 0.0
    %1233 = vmatpush1.msra.mxu0 0.0
    %1234 = vmatprep.subr.mxu0 0.0
    %1235 = vmatpush1.msra.mxu0 0.0
    %1236 = vmatprep.subr.mxu0 0.0
    %1237 = vmatpush1.msra.mxu0 0.0
    %1238 = vmatprep.subr.mxu0 0.0
    %1239 = vmatpush1.msra.mxu0 0.0
    %1240 = vmatprep.subr.mxu0 0.0
    %1241 = vmatpush1.msra.mxu0 0.0
    %1242 = vmatprep.subr.mxu0 0.0
    %1243 = vmatpush1.msra.mxu0 0.0
    %1244 = vmatprep.subr.mxu0 0.0
    %1245 = vmatpush1.msra.mxu0 0.0
    %1246 = vmatprep.subr.mxu0 0.0
    %1247 = vmatpush1.msra.mxu0 0.0
    %1248 = vmatprep.subr.mxu0 0.0
    %1249 = vmatpush1.msra.mxu0 0.0
    %1250 = vmatprep.subr.mxu0 0.0
    %1251 = vmatpush1.msra.mxu0 0.0
    %1252 = vmatprep.subr.mxu0 0.0
    %1253 = vmatpush1.msra.mxu0 0.0
    %1254 = vmatprep.subr.mxu0 0.0
    %v1255 = vand.u32 %v829, 4294901760
    %v1256 = vsub.f32 %v829, %v1255
    %v1257 = vand.u32 %v1256, 4294901760
    %1258 = vmatpush1.msra.mxu0 %v1257
    %1259 = vmatprep.subr.mxu0 0.0
    %1260 = vmatpush2.msra.mxu0 0.0
    %1261 = vmatprep.subr.mxu0 0.0
    %1262 = vmatpush2.msra.mxu0 0.0
    %1263 = vmatprep.subr.mxu0 0.0
    %1264 = vmatpush2.msra.mxu0 0.0
    %1265 = vmatprep.subr.mxu0 0.0
    %1266 = vmatpush2.msra.mxu0 0.0
    %1267 = vmatprep.subr.mxu0 0.0
    %1268 = vmatpush2.msra.mxu0 0.0
    %1269 = vmatprep.subr.mxu0 0.0
    %1270 = vmatpush2.msra.mxu0 0.0
    %1271 = vmatprep.subr.mxu0 0.0
    %1272 = vmatpush2.msra.mxu0 0.0
    %1273 = vmatprep.subr.mxu0 0.0
    %1274 = vmatpush2.msra.mxu0 0.0
    %1275 = vmatprep.subr.mxu0 0.0
    %1276 = vmatpush2.msra.mxu0 0.0
    %1277 = vmatprep.subr.mxu0 0.0
    %1278 = vmatpush2.msra.mxu0 0.0
    %1279 = vmatprep.subr.mxu0 0.0
    %1280 = vmatpush2.msra.mxu0 0.0
    %1281 = vmatprep.subr.mxu0 0.0
    %1282 = vmatpush2.msra.mxu0 0.0
    %1283 = vmatprep.subr.mxu0 0.0
    %1284 = vmatpush2.msra.mxu0 0.0
    %1285 = vmatprep.subr.mxu0 0.0
    %1286 = vmatpush2.msra.mxu0 0.0
    %1287 = vmatprep.subr.mxu0 0.0
    %1288 = vmatpush2.msra.mxu0 0.0
    %1289 = vmatprep.subr.mxu0 0.0
    %1290 = vmatpush2.msra.mxu0 0.0
    %1291 = vmatprep.mubr.f32.mxu0 0.0
    %v1292 = vand.u32 %v816, 4294901760
    %1293 = vmatmul.mubr.f32.gmra.mxu0 %v1292
    %v1294 = vpop.f32.mrf.mxu0
    %v1295 = vadd.f32 %v1197, %v1294
    %v1296 = vpop.f32.mrf.mxu0
    %1297 = vmatprep.mubr.f32.mxu0 0.0
    %v1298 = vand.u32 %v819, 4294901760
    %1299 = vmatmul.mubr.f32.gmra.mxu0 %v1298
    %v1300 = vpop.f32.mrf.mxu0
    %v1301 = vadd.f32 %v1205, %v1300
    %v1302 = vpop.f32.mrf.mxu0
    %1303 = vmatprep.mubr.f32.mxu0 0.0
    %v1304 = vand.u32 %v822, 4294901760
    %1305 = vmatmul.mubr.f32.gmra.mxu0 %v1304
    %v1306 = vpop.f32.mrf.mxu0
    %v1307 = vadd.f32 %v1213, %v1306
    %v1308 = vpop.f32.mrf.mxu0
    %1309 = vmatprep.mubr.f32.mxu0 0.0
    %v1310 = vand.u32 %v825, 4294901760
    %1311 = vmatmul.mubr.f32.gmra.mxu0 %v1310
    %v1312 = vpop.f32.mrf.mxu0
    %v1313 = vadd.f32 %v1221, %v1312
    %v1314 = vpop.f32.mrf.mxu0
    %1315 = vdwg.mxu0
    %1316 = vmatprep.subr.mxu0 0.0
    %1317 = vmatpush1.msra.mxu0 0.0
    %1318 = vmatprep.subr.mxu0 0.0
    %1319 = vmatpush1.msra.mxu0 0.0
    %1320 = vmatprep.subr.mxu0 0.0
    %1321 = vmatpush1.msra.mxu0 0.0
    %1322 = vmatprep.subr.mxu0 0.0
    %1323 = vmatpush1.msra.mxu0 0.0
    %1324 = vmatprep.subr.mxu0 0.0
    %1325 = vmatpush1.msra.mxu0 0.0
    %1326 = vmatprep.subr.mxu0 0.0
    %1327 = vmatpush1.msra.mxu0 0.0
    %1328 = vmatprep.subr.mxu0 0.0
    %1329 = vmatpush1.msra.mxu0 0.0
    %1330 = vmatprep.subr.mxu0 0.0
    %1331 = vmatpush1.msra.mxu0 0.0
    %1332 = vmatprep.subr.mxu0 0.0
    %1333 = vmatpush1.msra.mxu0 0.0
    %1334 = vmatprep.subr.mxu0 0.0
    %1335 = vmatpush1.msra.mxu0 0.0
    %1336 = vmatprep.subr.mxu0 0.0
    %1337 = vmatpush1.msra.mxu0 0.0
    %1338 = vmatprep.subr.mxu0 0.0
    %1339 = vmatpush1.msra.mxu0 0.0
    %1340 = vmatprep.subr.mxu0 0.0
    %1341 = vmatpush1.msra.mxu0 0.0
    %1342 = vmatprep.subr.mxu0 0.0
    %1343 = vmatpush1.msra.mxu0 0.0
    %1344 = vmatprep.subr.mxu0 0.0
    %1345 = vmatpush1.msra.mxu0 0.0
    %1346 = vmatprep.subr.mxu0 0.0
    %v1347 = vand.u32 %v829, 4294901760
    %1348 = vmatpush1.msra.mxu0 %v1347
    %1349 = vmatprep.subr.mxu0 0.0
    %1350 = vmatpush2.msra.mxu0 0.0
    %1351 = vmatprep.subr.mxu0 0.0
    %1352 = vmatpush2.msra.mxu0 0.0
    %1353 = vmatprep.subr.mxu0 0.0
    %1354 = vmatpush2.msra.mxu0 0.0
    %1355 = vmatprep.subr.mxu0 0.0
    %1356 = vmatpush2.msra.mxu0 0.0
    %1357 = vmatprep.subr.mxu0 0.0
    %1358 = vmatpush2.msra.mxu0 0.0
    %1359 = vmatprep.subr.mxu0 0.0
    %1360 = vmatpush2.msra.mxu0 0.0
    %1361 = vmatprep.subr.mxu0 0.0
    %1362 = vmatpush2.msra.mxu0 0.0
    %1363 = vmatprep.subr.mxu0 0.0
    %1364 = vmatpush2.msra.mxu0 0.0
    %1365 = vmatprep.subr.mxu0 0.0
    %1366 = vmatpush2.msra.mxu0 0.0
    %1367 = vmatprep.subr.mxu0 0.0
    %1368 = vmatpush2.msra.mxu0 0.0
    %1369 = vmatprep.subr.mxu0 0.0
    %1370 = vmatpush2.msra.mxu0 0.0
    %1371 = vmatprep.subr.mxu0 0.0
    %1372 = vmatpush2.msra.mxu0 0.0
    %1373 = vmatprep.subr.mxu0 0.0
    %1374 = vmatpush2.msra.mxu0 0.0
    %1375 = vmatprep.subr.mxu0 0.0
    %1376 = vmatpush2.msra.mxu0 0.0
    %1377 = vmatprep.subr.mxu0 0.0
    %1378 = vmatpush2.msra.mxu0 0.0
    %1379 = vmatprep.subr.mxu0 0.0
    %1380 = vmatpush2.msra.mxu0 0.0
    %1381 = vmatprep.mubr.f32.mxu0 0.0
    %v1382 = vand.u32 %v816, 4294901760
    %1383 = vmatmul.mubr.f32.gmra.mxu0 %v1382
    %v1384 = vpop.f32.mrf.mxu0
    %v1385 = vadd.f32 %v1295, %v1384
    %v1386 = vpop.f32.mrf.mxu0
    %1387 = vmatprep.mubr.f32.mxu0 0.0
    %v1388 = vand.u32 %v819, 4294901760
    %1389 = vmatmul.mubr.f32.gmra.mxu0 %v1388
    %v1390 = vpop.f32.mrf.mxu0
    %v1391 = vadd.f32 %v1301, %v1390
    %v1392 = vpop.f32.mrf.mxu0
    %1393 = vmatprep.mubr.f32.mxu0 0.0
    %v1394 = vand.u32 %v822, 4294901760
    %1395 = vmatmul.mubr.f32.gmra.mxu0 %v1394
    %v1396 = vpop.f32.mrf.mxu0
    %v1397 = vadd.f32 %v1307, %v1396
    %v1398 = vpop.f32.mrf.mxu0
    %1399 = vmatprep.mubr.f32.mxu0 0.0
    %v1400 = vand.u32 %v825, 4294901760
    %1401 = vmatmul.mubr.f32.gmra.mxu0 %v1400
    %v1402 = vpop.f32.mrf.mxu0
    %v1403 = vadd.f32 %v1313, %v1402
    %v1404 = vpop.f32.mrf.mxu0
    %1405 = vdwg.mxu0
    %v1406 = vsub.f32 %v18, %v1385
    %v1407 = vsub.f32 %v19, %v1391
    %v1408 = vsub.f32 %v20, %v1397
    %v1409 = vsub.f32 %v21, %v1403
    %v1410 = vmul.f32 %v1406, %v1406
    %v1411 = vmul.f32 %v1407, %v1407
    %v1412 = vmul.f32 %v1408, %v1408
    %v1413 = vmul.f32 %v1409, %v1409
    %1414 = vmatprep.subr.mxu0 0.0
    %v1415 = vand.u32 %v38, 4294901760
    %1416 = vmatpush1.msra.mxu0 %v1415
    %1417 = vmatprep.subr.mxu0 0.0
    %v1418 = vand.u32 %v37, 4294901760
    %1419 = vmatpush1.msra.mxu0 %v1418
    %1420 = vmatprep.subr.mxu0 0.0
    %v1421 = vand.u32 %v36, 4294901760
    %1422 = vmatpush1.msra.mxu0 %v1421
    %1423 = vmatprep.subr.mxu0 0.0
    %v1424 = vand.u32 %v35, 4294901760
    %1425 = vmatpush1.msra.mxu0 %v1424
    %1426 = vmatprep.subr.mxu0 0.0
    %v1427 = vand.u32 %v34, 4294901760
    %1428 = vmatpush1.msra.mxu0 %v1427
    %1429 = vmatprep.subr.mxu0 0.0
    %v1430 = vand.u32 %v33, 4294901760
    %1431 = vmatpush1.msra.mxu0 %v1430
    %1432 = vmatprep.subr.mxu0 0.0
    %v1433 = vand.u32 %v32, 4294901760
    %1434 = vmatpush1.msra.mxu0 %v1433
    %1435 = vmatprep.subr.mxu0 0.0
    %v1436 = vand.u32 %v31, 4294901760
    %1437 = vmatpush1.msra.mxu0 %v1436
    %1438 = vmatprep.subr.mxu0 0.0
    %v1439 = vand.u32 %v30, 4294901760
    %1440 = vmatpush1.msra.mxu0 %v1439
    %1441 = vmatprep.subr.mxu0 0.0
    %v1442 = vand.u32 %v29, 4294901760
    %1443 = vmatpush1.msra.mxu0 %v1442
    %1444 = vmatprep.subr.mxu0 0.0
    %v1445 = vand.u32 %v28, 4294901760
    %1446 = vmatpush1.msra.mxu0 %v1445
    %1447 = vmatprep.subr.mxu0 0.0
    %v1448 = vand.u32 %v27, 4294901760
    %1449 = vmatpush1.msra.mxu0 %v1448
    %1450 = vmatprep.subr.mxu0 0.0
    %v1451 = vand.u32 %v26, 4294901760
    %1452 = vmatpush1.msra.mxu0 %v1451
    %1453 = vmatprep.subr.mxu0 0.0
    %v1454 = vand.u32 %v25, 4294901760
    %1455 = vmatpush1.msra.mxu0 %v1454
    %1456 = vmatprep.subr.mxu0 0.0
    %v1457 = vand.u32 %v24, 4294901760
    %1458 = vmatpush1.msra.mxu0 %v1457
    %1459 = vmatprep.subr.mxu0 0.0
    %v1460 = vand.u32 %v23, 4294901760
    %1461 = vmatpush1.msra.mxu0 %v1460
    %1462 = vmatprep.subr.mxu0 0.0
    %1463 = vmatpush2.msra.mxu0 0.0
    %1464 = vmatprep.subr.mxu0 0.0
    %1465 = vmatpush2.msra.mxu0 0.0
    %1466 = vmatprep.subr.mxu0 0.0
    %1467 = vmatpush2.msra.mxu0 0.0
    %1468 = vmatprep.subr.mxu0 0.0
    %1469 = vmatpush2.msra.mxu0 0.0
    %1470 = vmatprep.subr.mxu0 0.0
    %1471 = vmatpush2.msra.mxu0 0.0
    %1472 = vmatprep.subr.mxu0 0.0
    %1473 = vmatpush2.msra.mxu0 0.0
    %1474 = vmatprep.subr.mxu0 0.0
    %1475 = vmatpush2.msra.mxu0 0.0
    %1476 = vmatprep.subr.mxu0 0.0
    %1477 = vmatpush2.msra.mxu0 0.0
    %1478 = vmatprep.subr.mxu0 0.0
    %1479 = vmatpush2.msra.mxu0 0.0
    %1480 = vmatprep.subr.mxu0 0.0
    %1481 = vmatpush2.msra.mxu0 0.0
    %1482 = vmatprep.subr.mxu0 0.0
    %1483 = vmatpush2.msra.mxu0 0.0
    %1484 = vmatprep.subr.mxu0 0.0
    %1485 = vmatpush2.msra.mxu0 0.0
    %1486 = vmatprep.subr.mxu0 0.0
    %1487 = vmatpush2.msra.mxu0 0.0
    %1488 = vmatprep.subr.mxu0 0.0
    %1489 = vmatpush2.msra.mxu0 0.0
    %1490 = vmatprep.subr.mxu0 0.0
    %1491 = vmatpush2.msra.mxu0 0.0
    %1492 = vmatprep.subr.mxu0 0.0
    %1493 = vmatpush2.msra.mxu0 0.0
    %1494 = vmatprep.mubr.f32.mxu0 0.0
    %v1495 = vand.u32 %v1410, 4294901760
    %v1496 = vsub.f32 %v1410, %v1495
    %v1497 = vand.u32 %v1496, 4294901760
    %v1498 = vsub.f32 %v1496, %v1497
    %v1499 = vand.u32 %v1498, 4294901760
    %1500 = vmatmul.mubr.f32.gmra.mxu0 %v1499
    %v1501 = vpop.f32.mrf.mxu0
    %v1502 = vadd.f32 0.0, %v1501
    %v1503 = vpop.f32.mrf.mxu0
    %1504 = vmatprep.mubr.f32.mxu0 0.0
    %v1505 = vand.u32 %v1411, 4294901760
    %v1506 = vsub.f32 %v1411, %v1505
    %v1507 = vand.u32 %v1506, 4294901760
    %v1508 = vsub.f32 %v1506, %v1507
    %v1509 = vand.u32 %v1508, 4294901760
    %1510 = vmatmul.mubr.f32.gmra.mxu0 %v1509
    %v1511 = vpop.f32.mrf.mxu0
    %v1512 = vadd.f32 0.0, %v1511
    %v1513 = vpop.f32.mrf.mxu0
    %1514 = vmatprep.mubr.f32.mxu0 0.0
    %v1515 = vand.u32 %v1412, 4294901760
    %v1516 = vsub.f32 %v1412, %v1515
    %v1517 = vand.u32 %v1516, 4294901760
    %v1518 = vsub.f32 %v1516, %v1517
    %v1519 = vand.u32 %v1518, 4294901760
    %1520 = vmatmul.mubr.f32.gmra.mxu0 %v1519
    %v1521 = vpop.f32.mrf.mxu0
    %v1522 = vadd.f32 0.0, %v1521
    %v1523 = vpop.f32.mrf.mxu0
    %1524 = vmatprep.mubr.f32.mxu0 0.0
    %v1525 = vand.u32 %v1413, 4294901760
    %v1526 = vsub.f32 %v1413, %v1525
    %v1527 = vand.u32 %v1526, 4294901760
    %v1528 = vsub.f32 %v1526, %v1527
    %v1529 = vand.u32 %v1528, 4294901760
    %1530 = vmatmul.mubr.f32.gmra.mxu0 %v1529
    %v1531 = vpop.f32.mrf.mxu0
    %v1532 = vadd.f32 0.0, %v1531
    %v1533 = vpop.f32.mrf.mxu0
    %1534 = vdwg.mxu0
    %1535 = vmatprep.subr.mxu0 0.0
    %v1536 = vand.u32 %v38, 4294901760
    %v1537 = vsub.f32 %v38, %v1536
    %v1538 = vand.u32 %v1537, 4294901760
    %v1539 = vsub.f32 %v1537, %v1538
    %v1540 = vand.u32 %v1539, 4294901760
    %1541 = vmatpush1.msra.mxu0 %v1540
    %1542 = vmatprep.subr.mxu0 0.0
    %v1543 = vand.u32 %v37, 4294901760
    %v1544 = vsub.f32 %v37, %v1543
    %v1545 = vand.u32 %v1544, 4294901760
    %v1546 = vsub.f32 %v1544, %v1545
    %v1547 = vand.u32 %v1546, 4294901760
    %1548 = vmatpush1.msra.mxu0 %v1547
    %1549 = vmatprep.subr.mxu0 0.0
    %v1550 = vand.u32 %v36, 4294901760
    %v1551 = vsub.f32 %v36, %v1550
    %v1552 = vand.u32 %v1551, 4294901760
    %v1553 = vsub.f32 %v1551, %v1552
    %v1554 = vand.u32 %v1553, 4294901760
    %1555 = vmatpush1.msra.mxu0 %v1554
    %1556 = vmatprep.subr.mxu0 0.0
    %v1557 = vand.u32 %v35, 4294901760
    %v1558 = vsub.f32 %v35, %v1557
    %v1559 = vand.u32 %v1558, 4294901760
    %v1560 = vsub.f32 %v1558, %v1559
    %v1561 = vand.u32 %v1560, 4294901760
    %1562 = vmatpush1.msra.mxu0 %v1561
    %1563 = vmatprep.subr.mxu0 0.0
    %v1564 = vand.u32 %v34, 4294901760
    %v1565 = vsub.f32 %v34, %v1564
    %v1566 = vand.u32 %v1565, 4294901760
    %v1567 = vsub.f32 %v1565, %v1566
    %v1568 = vand.u32 %v1567, 4294901760
    %1569 = vmatpush1.msra.mxu0 %v1568
    %1570 = vmatprep.subr.mxu0 0.0
    %v1571 = vand.u32 %v33, 4294901760
    %v1572 = vsub.f32 %v33, %v1571
    %v1573 = vand.u32 %v1572, 4294901760
    %v1574 = vsub.f32 %v1572, %v1573
    %v1575 = vand.u32 %v1574, 4294901760
    %1576 = vmatpush1.msra.mxu0 %v1575
    %1577 = vmatprep.subr.mxu0 0.0
    %v1578 = vand.u32 %v32, 4294901760
    %v1579 = vsub.f32 %v32, %v1578
    %v1580 = vand.u32 %v1579, 4294901760
    %v1581 = vsub.f32 %v1579, %v1580
    %v1582 = vand.u32 %v1581, 4294901760
    %1583 = vmatpush1.msra.mxu0 %v1582
    %1584 = vmatprep.subr.mxu0 0.0
    %v1585 = vand.u32 %v31, 4294901760
    %v1586 = vsub.f32 %v31, %v1585
    %v1587 = vand.u32 %v1586, 4294901760
    %v1588 = vsub.f32 %v1586, %v1587
    %v1589 = vand.u32 %v1588, 4294901760
    %1590 = vmatpush1.msra.mxu0 %v1589
    %1591 = vmatprep.subr.mxu0 0.0
    %v1592 = vand.u32 %v30, 4294901760
    %v1593 = vsub.f32 %v30, %v1592
    %v1594 = vand.u32 %v1593, 4294901760
    %v1595 = vsub.f32 %v1593, %v1594
    %v1596 = vand.u32 %v1595, 4294901760
    %1597 = vmatpush1.msra.mxu0 %v1596
    %1598 = vmatprep.subr.mxu0 0.0
    %v1599 = vand.u32 %v29, 4294901760
    %v1600 = vsub.f32 %v29, %v1599
    %v1601 = vand.u32 %v1600, 4294901760
    %v1602 = vsub.f32 %v1600, %v1601
    %v1603 = vand.u32 %v1602, 4294901760
    %1604 = vmatpush1.msra.mxu0 %v1603
    %1605 = vmatprep.subr.mxu0 0.0
    %v1606 = vand.u32 %v28, 4294901760
    %v1607 = vsub.f32 %v28, %v1606
    %v1608 = vand.u32 %v1607, 4294901760
    %v1609 = vsub.f32 %v1607, %v1608
    %v1610 = vand.u32 %v1609, 4294901760
    %1611 = vmatpush1.msra.mxu0 %v1610
    %1612 = vmatprep.subr.mxu0 0.0
    %v1613 = vand.u32 %v27, 4294901760
    %v1614 = vsub.f32 %v27, %v1613
    %v1615 = vand.u32 %v1614, 4294901760
    %v1616 = vsub.f32 %v1614, %v1615
    %v1617 = vand.u32 %v1616, 4294901760
    %1618 = vmatpush1.msra.mxu0 %v1617
    %1619 = vmatprep.subr.mxu0 0.0
    %v1620 = vand.u32 %v26, 4294901760
    %v1621 = vsub.f32 %v26, %v1620
    %v1622 = vand.u32 %v1621, 4294901760
    %v1623 = vsub.f32 %v1621, %v1622
    %v1624 = vand.u32 %v1623, 4294901760
    %1625 = vmatpush1.msra.mxu0 %v1624
    %1626 = vmatprep.subr.mxu0 0.0
    %v1627 = vand.u32 %v25, 4294901760
    %v1628 = vsub.f32 %v25, %v1627
    %v1629 = vand.u32 %v1628, 4294901760
    %v1630 = vsub.f32 %v1628, %v1629
    %v1631 = vand.u32 %v1630, 4294901760
    %1632 = vmatpush1.msra.mxu0 %v1631
    %1633 = vmatprep.subr.mxu0 0.0
    %v1634 = vand.u32 %v24, 4294901760
    %v1635 = vsub.f32 %v24, %v1634
    %v1636 = vand.u32 %v1635, 4294901760
    %v1637 = vsub.f32 %v1635, %v1636
    %v1638 = vand.u32 %v1637, 4294901760
    %1639 = vmatpush1.msra.mxu0 %v1638
    %1640 = vmatprep.subr.mxu0 0.0
    %v1641 = vand.u32 %v23, 4294901760
    %v1642 = vsub.f32 %v23, %v1641
    %v1643 = vand.u32 %v1642, 4294901760
    %v1644 = vsub.f32 %v1642, %v1643
    %v1645 = vand.u32 %v1644, 4294901760
    %1646 = vmatpush1.msra.mxu0 %v1645
    %1647 = vmatprep.subr.mxu0 0.0
    %1648 = vmatpush2.msra.mxu0 0.0
    %1649 = vmatprep.subr.mxu0 0.0
    %1650 = vmatpush2.msra.mxu0 0.0
    %1651 = vmatprep.subr.mxu0 0.0
    %1652 = vmatpush2.msra.mxu0 0.0
    %1653 = vmatprep.subr.mxu0 0.0
    %1654 = vmatpush2.msra.mxu0 0.0
    %1655 = vmatprep.subr.mxu0 0.0
    %1656 = vmatpush2.msra.mxu0 0.0
    %1657 = vmatprep.subr.mxu0 0.0
    %1658 = vmatpush2.msra.mxu0 0.0
    %1659 = vmatprep.subr.mxu0 0.0
    %1660 = vmatpush2.msra.mxu0 0.0
    %1661 = vmatprep.subr.mxu0 0.0
    %1662 = vmatpush2.msra.mxu0 0.0
    %1663 = vmatprep.subr.mxu0 0.0
    %1664 = vmatpush2.msra.mxu0 0.0
    %1665 = vmatprep.subr.mxu0 0.0
    %1666 = vmatpush2.msra.mxu0 0.0
    %1667 = vmatprep.subr.mxu0 0.0
    %1668 = vmatpush2.msra.mxu0 0.0
    %1669 = vmatprep.subr.mxu0 0.0
    %1670 = vmatpush2.msra.mxu0 0.0
    %1671 = vmatprep.subr.mxu0 0.0
    %1672 = vmatpush2.msra.mxu0 0.0
    %1673 = vmatprep.subr.mxu0 0.0
    %1674 = vmatpush2.msra.mxu0 0.0
    %1675 = vmatprep.subr.mxu0 0.0
    %1676 = vmatpush2.msra.mxu0 0.0
    %1677 = vmatprep.subr.mxu0 0.0
    %1678 = vmatpush2.msra.mxu0 0.0
    %1679 = vmatprep.mubr.f32.mxu0 0.0
    %v1680 = vand.u32 %v1410, 4294901760
    %1681 = vmatmul.mubr.f32.gmra.mxu0 %v1680
    %v1682 = vpop.f32.mrf.mxu0
    %v1683 = vadd.f32 %v1502, %v1682
    %v1684 = vpop.f32.mrf.mxu0
    %1685 = vmatprep.mubr.f32.mxu0 0.0
    %v1686 = vand.u32 %v1411, 4294901760
    %1687 = vmatmul.mubr.f32.gmra.mxu0 %v1686
    %v1688 = vpop.f32.mrf.mxu0
    %v1689 = vadd.f32 %v1512, %v1688
    %v1690 = vpop.f32.mrf.mxu0
    %1691 = vmatprep.mubr.f32.mxu0 0.0
    %v1692 = vand.u32 %v1412, 4294901760
    %1693 = vmatmul.mubr.f32.gmra.mxu0 %v1692
    %v1694 = vpop.f32.mrf.mxu0
    %v1695 = vadd.f32 %v1522, %v1694
    %v1696 = vpop.f32.mrf.mxu0
    %1697 = vmatprep.mubr.f32.mxu0 0.0
    %v1698 = vand.u32 %v1413, 4294901760
    %1699 = vmatmul.mubr.f32.gmra.mxu0 %v1698
    %v1700 = vpop.f32.mrf.mxu0
    %v1701 = vadd.f32 %v1532, %v1700
    %v1702 = vpop.f32.mrf.mxu0
    %1703 = vdwg.mxu0
    %1704 = vmatprep.subr.mxu0 0.0
    %v1705 = vand.u32 %v38, 4294901760
    %v1706 = vsub.f32 %v38, %v1705
    %1707 = vmatpush1.msra.mxu0 %v1706
    %1708 = vmatprep.subr.mxu0 0.0
    %v1709 = vand.u32 %v37, 4294901760
    %v1710 = vsub.f32 %v37, %v1709
    %1711 = vmatpush1.msra.mxu0 %v1710
    %1712 = vmatprep.subr.mxu0 0.0
    %v1713 = vand.u32 %v36, 4294901760
    %v1714 = vsub.f32 %v36, %v1713
    %1715 = vmatpush1.msra.mxu0 %v1714
    %1716 = vmatprep.subr.mxu0 0.0
    %v1717 = vand.u32 %v35, 4294901760
    %v1718 = vsub.f32 %v35, %v1717
    %1719 = vmatpush1.msra.mxu0 %v1718
    %1720 = vmatprep.subr.mxu0 0.0
    %v1721 = vand.u32 %v34, 4294901760
    %v1722 = vsub.f32 %v34, %v1721
    %1723 = vmatpush1.msra.mxu0 %v1722
    %1724 = vmatprep.subr.mxu0 0.0
    %v1725 = vand.u32 %v33, 4294901760
    %v1726 = vsub.f32 %v33, %v1725
    %1727 = vmatpush1.msra.mxu0 %v1726
    %1728 = vmatprep.subr.mxu0 0.0
    %v1729 = vand.u32 %v32, 4294901760
    %v1730 = vsub.f32 %v32, %v1729
    %1731 = vmatpush1.msra.mxu0 %v1730
    %1732 = vmatprep.subr.mxu0 0.0
    %v1733 = vand.u32 %v31, 4294901760
    %v1734 = vsub.f32 %v31, %v1733
    %1735 = vmatpush1.msra.mxu0 %v1734
    %1736 = vmatprep.subr.mxu0 0.0
    %v1737 = vand.u32 %v30, 4294901760
    %v1738 = vsub.f32 %v30, %v1737
    %1739 = vmatpush1.msra.mxu0 %v1738
    %1740 = vmatprep.subr.mxu0 0.0
    %v1741 = vand.u32 %v29, 4294901760
    %v1742 = vsub.f32 %v29, %v1741
    %1743 = vmatpush1.msra.mxu0 %v1742
    %1744 = vmatprep.subr.mxu0 0.0
    %v1745 = vand.u32 %v28, 4294901760
    %v1746 = vsub.f32 %v28, %v1745
    %1747 = vmatpush1.msra.mxu0 %v1746
    %1748 = vmatprep.subr.mxu0 0.0
    %v1749 = vand.u32 %v27, 4294901760
    %v1750 = vsub.f32 %v27, %v1749
    %1751 = vmatpush1.msra.mxu0 %v1750
    %1752 = vmatprep.subr.mxu0 0.0
    %v1753 = vand.u32 %v26, 4294901760
    %v1754 = vsub.f32 %v26, %v1753
    %1755 = vmatpush1.msra.mxu0 %v1754
    %1756 = vmatprep.subr.mxu0 0.0
    %v1757 = vand.u32 %v25, 4294901760
    %v1758 = vsub.f32 %v25, %v1757
    %1759 = vmatpush1.msra.mxu0 %v1758
    %1760 = vmatprep.subr.mxu0 0.0
    %v1761 = vand.u32 %v24, 4294901760
    %v1762 = vsub.f32 %v24, %v1761
    %1763 = vmatpush1.msra.mxu0 %v1762
    %1764 = vmatprep.subr.mxu0 0.0
    %v1765 = vand.u32 %v23, 4294901760
    %v1766 = vsub.f32 %v23, %v1765
    %1767 = vmatpush1.msra.mxu0 %v1766
    %1768 = vmatprep.subr.mxu0 0.0
    %1769 = vmatpush2.msra.mxu0 0.0
    %1770 = vmatprep.subr.mxu0 0.0
    %1771 = vmatpush2.msra.mxu0 0.0
    %1772 = vmatprep.subr.mxu0 0.0
    %1773 = vmatpush2.msra.mxu0 0.0
    %1774 = vmatprep.subr.mxu0 0.0
    %1775 = vmatpush2.msra.mxu0 0.0
    %1776 = vmatprep.subr.mxu0 0.0
    %1777 = vmatpush2.msra.mxu0 0.0
    %1778 = vmatprep.subr.mxu0 0.0
    %1779 = vmatpush2.msra.mxu0 0.0
    %1780 = vmatprep.subr.mxu0 0.0
    %1781 = vmatpush2.msra.mxu0 0.0
    %1782 = vmatprep.subr.mxu0 0.0
    %1783 = vmatpush2.msra.mxu0 0.0
    %1784 = vmatprep.subr.mxu0 0.0
    %1785 = vmatpush2.msra.mxu0 0.0
    %1786 = vmatprep.subr.mxu0 0.0
    %1787 = vmatpush2.msra.mxu0 0.0
    %1788 = vmatprep.subr.mxu0 0.0
    %1789 = vmatpush2.msra.mxu0 0.0
    %1790 = vmatprep.subr.mxu0 0.0
    %1791 = vmatpush2.msra.mxu0 0.0
    %1792 = vmatprep.subr.mxu0 0.0
    %1793 = vmatpush2.msra.mxu0 0.0
    %1794 = vmatprep.subr.mxu0 0.0
    %1795 = vmatpush2.msra.mxu0 0.0
    %1796 = vmatprep.subr.mxu0 0.0
    %1797 = vmatpush2.msra.mxu0 0.0
    %1798 = vmatprep.subr.mxu0 0.0
    %1799 = vmatpush2.msra.mxu0 0.0
    %1800 = vmatprep.mubr.f32.mxu0 0.0
    %v1801 = vand.u32 %v1410, 4294901760
    %v1802 = vsub.f32 %v1410, %v1801
    %1803 = vmatmul.mubr.f32.gmra.mxu0 %v1802
    %v1804 = vpop.f32.mrf.mxu0
    %v1805 = vadd.f32 %v1683, %v1804
    %v1806 = vpop.f32.mrf.mxu0
    %1807 = vmatprep.mubr.f32.mxu0 0.0
    %v1808 = vand.u32 %v1411, 4294901760
    %v1809 = vsub.f32 %v1411, %v1808
    %1810 = vmatmul.mubr.f32.gmra.mxu0 %v1809
    %v1811 = vpop.f32.mrf.mxu0
    %v1812 = vadd.f32 %v1689, %v1811
    %v1813 = vpop.f32.mrf.mxu0
    %1814 = vmatprep.mubr.f32.mxu0 0.0
    %v1815 = vand.u32 %v1412, 4294901760
    %v1816 = vsub.f32 %v1412, %v1815
    %1817 = vmatmul.mubr.f32.gmra.mxu0 %v1816
    %v1818 = vpop.f32.mrf.mxu0
    %v1819 = vadd.f32 %v1695, %v1818
    %v1820 = vpop.f32.mrf.mxu0
    %1821 = vmatprep.mubr.f32.mxu0 0.0
    %v1822 = vand.u32 %v1413, 4294901760
    %v1823 = vsub.f32 %v1413, %v1822
    %1824 = vmatmul.mubr.f32.gmra.mxu0 %v1823
    %v1825 = vpop.f32.mrf.mxu0
    %v1826 = vadd.f32 %v1701, %v1825
    %v1827 = vpop.f32.mrf.mxu0
    %1828 = vdwg.mxu0
    %1829 = vmatprep.subr.mxu0 0.0
    %v1830 = vand.u32 %v38, 4294901760
    %1831 = vmatpush1.msra.mxu0 %v1830
    %1832 = vmatprep.subr.mxu0 0.0
    %v1833 = vand.u32 %v37, 4294901760
    %1834 = vmatpush1.msra.mxu0 %v1833
    %1835 = vmatprep.subr.mxu0 0.0
    %v1836 = vand.u32 %v36, 4294901760
    %1837 = vmatpush1.msra.mxu0 %v1836
    %1838 = vmatprep.subr.mxu0 0.0
    %v1839 = vand.u32 %v35, 4294901760
    %1840 = vmatpush1.msra.mxu0 %v1839
    %1841 = vmatprep.subr.mxu0 0.0
    %v1842 = vand.u32 %v34, 4294901760
    %1843 = vmatpush1.msra.mxu0 %v1842
    %1844 = vmatprep.subr.mxu0 0.0
    %v1845 = vand.u32 %v33, 4294901760
    %1846 = vmatpush1.msra.mxu0 %v1845
    %1847 = vmatprep.subr.mxu0 0.0
    %v1848 = vand.u32 %v32, 4294901760
    %1849 = vmatpush1.msra.mxu0 %v1848
    %1850 = vmatprep.subr.mxu0 0.0
    %v1851 = vand.u32 %v31, 4294901760
    %1852 = vmatpush1.msra.mxu0 %v1851
    %1853 = vmatprep.subr.mxu0 0.0
    %v1854 = vand.u32 %v30, 4294901760
    %1855 = vmatpush1.msra.mxu0 %v1854
    %1856 = vmatprep.subr.mxu0 0.0
    %v1857 = vand.u32 %v29, 4294901760
    %1858 = vmatpush1.msra.mxu0 %v1857
    %1859 = vmatprep.subr.mxu0 0.0
    %v1860 = vand.u32 %v28, 4294901760
    %1861 = vmatpush1.msra.mxu0 %v1860
    %1862 = vmatprep.subr.mxu0 0.0
    %v1863 = vand.u32 %v27, 4294901760
    %1864 = vmatpush1.msra.mxu0 %v1863
    %1865 = vmatprep.subr.mxu0 0.0
    %v1866 = vand.u32 %v26, 4294901760
    %1867 = vmatpush1.msra.mxu0 %v1866
    %1868 = vmatprep.subr.mxu0 0.0
    %v1869 = vand.u32 %v25, 4294901760
    %1870 = vmatpush1.msra.mxu0 %v1869
    %1871 = vmatprep.subr.mxu0 0.0
    %v1872 = vand.u32 %v24, 4294901760
    %1873 = vmatpush1.msra.mxu0 %v1872
    %1874 = vmatprep.subr.mxu0 0.0
    %v1875 = vand.u32 %v23, 4294901760
    %1876 = vmatpush1.msra.mxu0 %v1875
    %1877 = vmatprep.subr.mxu0 0.0
    %1878 = vmatpush2.msra.mxu0 0.0
    %1879 = vmatprep.subr.mxu0 0.0
    %1880 = vmatpush2.msra.mxu0 0.0
    %1881 = vmatprep.subr.mxu0 0.0
    %1882 = vmatpush2.msra.mxu0 0.0
    %1883 = vmatprep.subr.mxu0 0.0
    %1884 = vmatpush2.msra.mxu0 0.0
    %1885 = vmatprep.subr.mxu0 0.0
    %1886 = vmatpush2.msra.mxu0 0.0
    %1887 = vmatprep.subr.mxu0 0.0
    %1888 = vmatpush2.msra.mxu0 0.0
    %1889 = vmatprep.subr.mxu0 0.0
    %1890 = vmatpush2.msra.mxu0 0.0
    %1891 = vmatprep.subr.mxu0 0.0
    %1892 = vmatpush2.msra.mxu0 0.0
    %1893 = vmatprep.subr.mxu0 0.0
    %1894 = vmatpush2.msra.mxu0 0.0
    %1895 = vmatprep.subr.mxu0 0.0
    %1896 = vmatpush2.msra.mxu0 0.0
    %1897 = vmatprep.subr.mxu0 0.0
    %1898 = vmatpush2.msra.mxu0 0.0
    %1899 = vmatprep.subr.mxu0 0.0
    %1900 = vmatpush2.msra.mxu0 0.0
    %1901 = vmatprep.subr.mxu0 0.0
    %1902 = vmatpush2.msra.mxu0 0.0
    %1903 = vmatprep.subr.mxu0 0.0
    %1904 = vmatpush2.msra.mxu0 0.0
    %1905 = vmatprep.subr.mxu0 0.0
    %1906 = vmatpush2.msra.mxu0 0.0
    %1907 = vmatprep.subr.mxu0 0.0
    %1908 = vmatpush2.msra.mxu0 0.0
    %1909 = vmatprep.mubr.f32.mxu0 0.0
    %v1910 = vand.u32 %v1410, 4294901760
    %v1911 = vsub.f32 %v1410, %v1910
    %v1912 = vand.u32 %v1911, 4294901760
    %1913 = vmatmul.mubr.f32.gmra.mxu0 %v1912
    %v1914 = vpop.f32.mrf.mxu0
    %v1915 = vadd.f32 %v1805, %v1914
    %v1916 = vpop.f32.mrf.mxu0
    %1917 = vmatprep.mubr.f32.mxu0 0.0
    %v1918 = vand.u32 %v1411, 4294901760
    %v1919 = vsub.f32 %v1411, %v1918
    %v1920 = vand.u32 %v1919, 4294901760
    %1921 = vmatmul.mubr.f32.gmra.mxu0 %v1920
    %v1922 = vpop.f32.mrf.mxu0
    %v1923 = vadd.f32 %v1812, %v1922
    %v1924 = vpop.f32.mrf.mxu0
    %1925 = vmatprep.mubr.f32.mxu0 0.0
    %v1926 = vand.u32 %v1412, 4294901760
    %v1927 = vsub.f32 %v1412, %v1926
    %v1928 = vand.u32 %v1927, 4294901760
    %1929 = vmatmul.mubr.f32.gmra.mxu0 %v1928
    %v1930 = vpop.f32.mrf.mxu0
    %v1931 = vadd.f32 %v1819, %v1930
    %v1932 = vpop.f32.mrf.mxu0
    %1933 = vmatprep.mubr.f32.mxu0 0.0
    %v1934 = vand.u32 %v1413, 4294901760
    %v1935 = vsub.f32 %v1413, %v1934
    %v1936 = vand.u32 %v1935, 4294901760
    %1937 = vmatmul.mubr.f32.gmra.mxu0 %v1936
    %v1938 = vpop.f32.mrf.mxu0
    %v1939 = vadd.f32 %v1826, %v1938
    %v1940 = vpop.f32.mrf.mxu0
    %1941 = vdwg.mxu0
    %1942 = vmatprep.subr.mxu0 0.0
    %v1943 = vand.u32 %v38, 4294901760
    %v1944 = vsub.f32 %v38, %v1943
    %v1945 = vand.u32 %v1944, 4294901760
    %1946 = vmatpush1.msra.mxu0 %v1945
    %1947 = vmatprep.subr.mxu0 0.0
    %v1948 = vand.u32 %v37, 4294901760
    %v1949 = vsub.f32 %v37, %v1948
    %v1950 = vand.u32 %v1949, 4294901760
    %1951 = vmatpush1.msra.mxu0 %v1950
    %1952 = vmatprep.subr.mxu0 0.0
    %v1953 = vand.u32 %v36, 4294901760
    %v1954 = vsub.f32 %v36, %v1953
    %v1955 = vand.u32 %v1954, 4294901760
    %1956 = vmatpush1.msra.mxu0 %v1955
    %1957 = vmatprep.subr.mxu0 0.0
    %v1958 = vand.u32 %v35, 4294901760
    %v1959 = vsub.f32 %v35, %v1958
    %v1960 = vand.u32 %v1959, 4294901760
    %1961 = vmatpush1.msra.mxu0 %v1960
    %1962 = vmatprep.subr.mxu0 0.0
    %v1963 = vand.u32 %v34, 4294901760
    %v1964 = vsub.f32 %v34, %v1963
    %v1965 = vand.u32 %v1964, 4294901760
    %1966 = vmatpush1.msra.mxu0 %v1965
    %1967 = vmatprep.subr.mxu0 0.0
    %v1968 = vand.u32 %v33, 4294901760
    %v1969 = vsub.f32 %v33, %v1968
    %v1970 = vand.u32 %v1969, 4294901760
    %1971 = vmatpush1.msra.mxu0 %v1970
    %1972 = vmatprep.subr.mxu0 0.0
    %v1973 = vand.u32 %v32, 4294901760
    %v1974 = vsub.f32 %v32, %v1973
    %v1975 = vand.u32 %v1974, 4294901760
    %1976 = vmatpush1.msra.mxu0 %v1975
    %1977 = vmatprep.subr.mxu0 0.0
    %v1978 = vand.u32 %v31, 4294901760
    %v1979 = vsub.f32 %v31, %v1978
    %v1980 = vand.u32 %v1979, 4294901760
    %1981 = vmatpush1.msra.mxu0 %v1980
    %1982 = vmatprep.subr.mxu0 0.0
    %v1983 = vand.u32 %v30, 4294901760
    %v1984 = vsub.f32 %v30, %v1983
    %v1985 = vand.u32 %v1984, 4294901760
    %1986 = vmatpush1.msra.mxu0 %v1985
    %1987 = vmatprep.subr.mxu0 0.0
    %v1988 = vand.u32 %v29, 4294901760
    %v1989 = vsub.f32 %v29, %v1988
    %v1990 = vand.u32 %v1989, 4294901760
    %1991 = vmatpush1.msra.mxu0 %v1990
    %1992 = vmatprep.subr.mxu0 0.0
    %v1993 = vand.u32 %v28, 4294901760
    %v1994 = vsub.f32 %v28, %v1993
    %v1995 = vand.u32 %v1994, 4294901760
    %1996 = vmatpush1.msra.mxu0 %v1995
    %1997 = vmatprep.subr.mxu0 0.0
    %v1998 = vand.u32 %v27, 4294901760
    %v1999 = vsub.f32 %v27, %v1998
    %v2000 = vand.u32 %v1999, 4294901760
    %2001 = vmatpush1.msra.mxu0 %v2000
    %2002 = vmatprep.subr.mxu0 0.0
    %v2003 = vand.u32 %v26, 4294901760
    %v2004 = vsub.f32 %v26, %v2003
    %v2005 = vand.u32 %v2004, 4294901760
    %2006 = vmatpush1.msra.mxu0 %v2005
    %2007 = vmatprep.subr.mxu0 0.0
    %v2008 = vand.u32 %v25, 4294901760
    %v2009 = vsub.f32 %v25, %v2008
    %v2010 = vand.u32 %v2009, 4294901760
    %2011 = vmatpush1.msra.mxu0 %v2010
    %2012 = vmatprep.subr.mxu0 0.0
    %v2013 = vand.u32 %v24, 4294901760
    %v2014 = vsub.f32 %v24, %v2013
    %v2015 = vand.u32 %v2014, 4294901760
    %2016 = vmatpush1.msra.mxu0 %v2015
    %2017 = vmatprep.subr.mxu0 0.0
    %v2018 = vand.u32 %v23, 4294901760
    %v2019 = vsub.f32 %v23, %v2018
    %v2020 = vand.u32 %v2019, 4294901760
    %2021 = vmatpush1.msra.mxu0 %v2020
    %2022 = vmatprep.subr.mxu0 0.0
    %2023 = vmatpush2.msra.mxu0 0.0
    %2024 = vmatprep.subr.mxu0 0.0
    %2025 = vmatpush2.msra.mxu0 0.0
    %2026 = vmatprep.subr.mxu0 0.0
    %2027 = vmatpush2.msra.mxu0 0.0
    %2028 = vmatprep.subr.mxu0 0.0
    %2029 = vmatpush2.msra.mxu0 0.0
    %2030 = vmatprep.subr.mxu0 0.0
    %2031 = vmatpush2.msra.mxu0 0.0
    %2032 = vmatprep.subr.mxu0 0.0
    %2033 = vmatpush2.msra.mxu0 0.0
    %2034 = vmatprep.subr.mxu0 0.0
    %2035 = vmatpush2.msra.mxu0 0.0
    %2036 = vmatprep.subr.mxu0 0.0
    %2037 = vmatpush2.msra.mxu0 0.0
    %2038 = vmatprep.subr.mxu0 0.0
    %2039 = vmatpush2.msra.mxu0 0.0
    %2040 = vmatprep.subr.mxu0 0.0
    %2041 = vmatpush2.msra.mxu0 0.0
    %2042 = vmatprep.subr.mxu0 0.0
    %2043 = vmatpush2.msra.mxu0 0.0
    %2044 = vmatprep.subr.mxu0 0.0
    %2045 = vmatpush2.msra.mxu0 0.0
    %2046 = vmatprep.subr.mxu0 0.0
    %2047 = vmatpush2.msra.mxu0 0.0
    %2048 = vmatprep.subr.mxu0 0.0
    %2049 = vmatpush2.msra.mxu0 0.0
    %2050 = vmatprep.subr.mxu0 0.0
    %2051 = vmatpush2.msra.mxu0 0.0
    %2052 = vmatprep.subr.mxu0 0.0
    %2053 = vmatpush2.msra.mxu0 0.0
    %2054 = vmatprep.mubr.f32.mxu0 0.0
    %v2055 = vand.u32 %v1410, 4294901760
    %2056 = vmatmul.mubr.f32.gmra.mxu0 %v2055
    %v2057 = vpop.f32.mrf.mxu0
    %v2058 = vadd.f32 %v1915, %v2057
    %v2059 = vpop.f32.mrf.mxu0
    %2060 = vmatprep.mubr.f32.mxu0 0.0
    %v2061 = vand.u32 %v1411, 4294901760
    %2062 = vmatmul.mubr.f32.gmra.mxu0 %v2061
    %v2063 = vpop.f32.mrf.mxu0
    %v2064 = vadd.f32 %v1923, %v2063
    %v2065 = vpop.f32.mrf.mxu0
    %2066 = vmatprep.mubr.f32.mxu0 0.0
    %v2067 = vand.u32 %v1412, 4294901760
    %2068 = vmatmul.mubr.f32.gmra.mxu0 %v2067
    %v2069 = vpop.f32.mrf.mxu0
    %v2070 = vadd.f32 %v1931, %v2069
    %v2071 = vpop.f32.mrf.mxu0
    %2072 = vmatprep.mubr.f32.mxu0 0.0
    %v2073 = vand.u32 %v1413, 4294901760
    %2074 = vmatmul.mubr.f32.gmra.mxu0 %v2073
    %v2075 = vpop.f32.mrf.mxu0
    %v2076 = vadd.f32 %v1939, %v2075
    %v2077 = vpop.f32.mrf.mxu0
    %2078 = vdwg.mxu0
    %2079 = vmatprep.subr.mxu0 0.0
    %v2080 = vand.u32 %v38, 4294901760
    %2081 = vmatpush1.msra.mxu0 %v2080
    %2082 = vmatprep.subr.mxu0 0.0
    %v2083 = vand.u32 %v37, 4294901760
    %2084 = vmatpush1.msra.mxu0 %v2083
    %2085 = vmatprep.subr.mxu0 0.0
    %v2086 = vand.u32 %v36, 4294901760
    %2087 = vmatpush1.msra.mxu0 %v2086
    %2088 = vmatprep.subr.mxu0 0.0
    %v2089 = vand.u32 %v35, 4294901760
    %2090 = vmatpush1.msra.mxu0 %v2089
    %2091 = vmatprep.subr.mxu0 0.0
    %v2092 = vand.u32 %v34, 4294901760
    %2093 = vmatpush1.msra.mxu0 %v2092
    %2094 = vmatprep.subr.mxu0 0.0
    %v2095 = vand.u32 %v33, 4294901760
    %2096 = vmatpush1.msra.mxu0 %v2095
    %2097 = vmatprep.subr.mxu0 0.0
    %v2098 = vand.u32 %v32, 4294901760
    %2099 = vmatpush1.msra.mxu0 %v2098
    %2100 = vmatprep.subr.mxu0 0.0
    %v2101 = vand.u32 %v31, 4294901760
    %2102 = vmatpush1.msra.mxu0 %v2101
    %2103 = vmatprep.subr.mxu0 0.0
    %v2104 = vand.u32 %v30, 4294901760
    %2105 = vmatpush1.msra.mxu0 %v2104
    %2106 = vmatprep.subr.mxu0 0.0
    %v2107 = vand.u32 %v29, 4294901760
    %2108 = vmatpush1.msra.mxu0 %v2107
    %2109 = vmatprep.subr.mxu0 0.0
    %v2110 = vand.u32 %v28, 4294901760
    %2111 = vmatpush1.msra.mxu0 %v2110
    %2112 = vmatprep.subr.mxu0 0.0
    %v2113 = vand.u32 %v27, 4294901760
    %2114 = vmatpush1.msra.mxu0 %v2113
    %2115 = vmatprep.subr.mxu0 0.0
    %v2116 = vand.u32 %v26, 4294901760
    %2117 = vmatpush1.msra.mxu0 %v2116
    %2118 = vmatprep.subr.mxu0 0.0
    %v2119 = vand.u32 %v25, 4294901760
    %2120 = vmatpush1.msra.mxu0 %v2119
    %2121 = vmatprep.subr.mxu0 0.0
    %v2122 = vand.u32 %v24, 4294901760
    %2123 = vmatpush1.msra.mxu0 %v2122
    %2124 = vmatprep.subr.mxu0 0.0
    %v2125 = vand.u32 %v23, 4294901760
    %2126 = vmatpush1.msra.mxu0 %v2125
    %2127 = vmatprep.subr.mxu0 0.0
    %2128 = vmatpush2.msra.mxu0 0.0
    %2129 = vmatprep.subr.mxu0 0.0
    %2130 = vmatpush2.msra.mxu0 0.0
    %2131 = vmatprep.subr.mxu0 0.0
    %2132 = vmatpush2.msra.mxu0 0.0
    %2133 = vmatprep.subr.mxu0 0.0
    %2134 = vmatpush2.msra.mxu0 0.0
    %2135 = vmatprep.subr.mxu0 0.0
    %2136 = vmatpush2.msra.mxu0 0.0
    %2137 = vmatprep.subr.mxu0 0.0
    %2138 = vmatpush2.msra.mxu0 0.0
    %2139 = vmatprep.subr.mxu0 0.0
    %2140 = vmatpush2.msra.mxu0 0.0
    %2141 = vmatprep.subr.mxu0 0.0
    %2142 = vmatpush2.msra.mxu0 0.0
    %2143 = vmatprep.subr.mxu0 0.0
    %2144 = vmatpush2.msra.mxu0 0.0
    %2145 = vmatprep.subr.mxu0 0.0
    %2146 = vmatpush2.msra.mxu0 0.0
    %2147 = vmatprep.subr.mxu0 0.0
    %2148 = vmatpush2.msra.mxu0 0.0
    %2149 = vmatprep.subr.mxu0 0.0
    %2150 = vmatpush2.msra.mxu0 0.0
    %2151 = vmatprep.subr.mxu0 0.0
    %2152 = vmatpush2.msra.mxu0 0.0
    %2153 = vmatprep.subr.mxu0 0.0
    %2154 = vmatpush2.msra.mxu0 0.0
    %2155 = vmatprep.subr.mxu0 0.0
    %2156 = vmatpush2.msra.mxu0 0.0
    %2157 = vmatprep.subr.mxu0 0.0
    %2158 = vmatpush2.msra.mxu0 0.0
    %2159 = vmatprep.mubr.f32.mxu0 0.0
    %v2160 = vand.u32 %v1410, 4294901760
    %2161 = vmatmul.mubr.f32.gmra.mxu0 %v2160
    %v2162 = vpop.f32.mrf.mxu0
    %v2163 = vadd.f32 %v2058, %v2162
    %v2164 = vpop.f32.mrf.mxu0
    %2165 = vmatprep.mubr.f32.mxu0 0.0
    %v2166 = vand.u32 %v1411, 4294901760
    %2167 = vmatmul.mubr.f32.gmra.mxu0 %v2166
    %v2168 = vpop.f32.mrf.mxu0
    %v2169 = vadd.f32 %v2064, %v2168
    %v2170 = vpop.f32.mrf.mxu0
    %2171 = vmatprep.mubr.f32.mxu0 0.0
    %v2172 = vand.u32 %v1412, 4294901760
    %2173 = vmatmul.mubr.f32.gmra.mxu0 %v2172
    %v2174 = vpop.f32.mrf.mxu0
    %v2175 = vadd.f32 %v2070, %v2174
    %v2176 = vpop.f32.mrf.mxu0
    %2177 = vmatprep.mubr.f32.mxu0 0.0
    %v2178 = vand.u32 %v1413, 4294901760
    %2179 = vmatmul.mubr.f32.gmra.mxu0 %v2178
    %v2180 = vpop.f32.mrf.mxu0
    %v2181 = vadd.f32 %v2076, %v2180
    %v2182 = vpop.f32.mrf.mxu0
    %2183 = vdwg.mxu0
    %v2184 = vmul.f32 %v2163, 0.03125
    %v2185 = vmul.f32 %v2169, 0.03125
    %v2186 = vmul.f32 %v2175, 0.03125
    %v2187 = vmul.f32 %v2181, 0.03125
    %v2188 = vadd.f32 %v2184, 1e-05
    %v2189 = vadd.f32 %v2185, 1e-05
    %v2190 = vadd.f32 %v2186, 1e-05
    %v2191 = vadd.f32 %v2187, 1e-05
    %v2192 = vrsqrt.pop %v2188
    %v2193 = vrsqrt.pop %v2189
    %v2194 = vrsqrt.pop %v2190
    %v2195 = vrsqrt.pop %v2191
    %v2197 = vsel %vm814, %v2192, 0
    %v2200 = vsel %vm814, %v2193, 0
    %v2203 = vsel %vm814, %v2194, 0
    %v2206 = vsel %vm814, %v2195, 0
    %2208 = vmatprep.subr.mxu0 0.0
    %2209 = vmatpush1.msra.mxu0 0.0
    %2210 = vmatprep.subr.mxu0 0.0
    %2211 = vmatpush1.msra.mxu0 0.0
    %2212 = vmatprep.subr.mxu0 0.0
    %2213 = vmatpush1.msra.mxu0 0.0
    %2214 = vmatprep.subr.mxu0 0.0
    %2215 = vmatpush1.msra.mxu0 0.0
    %2216 = vmatprep.subr.mxu0 0.0
    %2217 = vmatpush1.msra.mxu0 0.0
    %2218 = vmatprep.subr.mxu0 0.0
    %2219 = vmatpush1.msra.mxu0 0.0
    %2220 = vmatprep.subr.mxu0 0.0
    %2221 = vmatpush1.msra.mxu0 0.0
    %2222 = vmatprep.subr.mxu0 0.0
    %2223 = vmatpush1.msra.mxu0 0.0
    %2224 = vmatprep.subr.mxu0 0.0
    %2225 = vmatpush1.msra.mxu0 0.0
    %2226 = vmatprep.subr.mxu0 0.0
    %2227 = vmatpush1.msra.mxu0 0.0
    %2228 = vmatprep.subr.mxu0 0.0
    %2229 = vmatpush1.msra.mxu0 0.0
    %2230 = vmatprep.subr.mxu0 0.0
    %2231 = vmatpush1.msra.mxu0 0.0
    %2232 = vmatprep.subr.mxu0 0.0
    %2233 = vmatpush1.msra.mxu0 0.0
    %2234 = vmatprep.subr.mxu0 0.0
    %2235 = vmatpush1.msra.mxu0 0.0
    %2236 = vmatprep.subr.mxu0 0.0
    %2237 = vmatpush1.msra.mxu0 0.0
    %2238 = vmatprep.subr.mxu0 0.0
    %v2239 = vand.u32 %v829, 4294901760
    %2240 = vmatpush1.msra.mxu0 %v2239
    %2241 = vmatprep.subr.mxu0 0.0
    %2242 = vmatpush2.msra.mxu0 0.0
    %2243 = vmatprep.subr.mxu0 0.0
    %2244 = vmatpush2.msra.mxu0 0.0
    %2245 = vmatprep.subr.mxu0 0.0
    %2246 = vmatpush2.msra.mxu0 0.0
    %2247 = vmatprep.subr.mxu0 0.0
    %2248 = vmatpush2.msra.mxu0 0.0
    %2249 = vmatprep.subr.mxu0 0.0
    %2250 = vmatpush2.msra.mxu0 0.0
    %2251 = vmatprep.subr.mxu0 0.0
    %2252 = vmatpush2.msra.mxu0 0.0
    %2253 = vmatprep.subr.mxu0 0.0
    %2254 = vmatpush2.msra.mxu0 0.0
    %2255 = vmatprep.subr.mxu0 0.0
    %2256 = vmatpush2.msra.mxu0 0.0
    %2257 = vmatprep.subr.mxu0 0.0
    %2258 = vmatpush2.msra.mxu0 0.0
    %2259 = vmatprep.subr.mxu0 0.0
    %2260 = vmatpush2.msra.mxu0 0.0
    %2261 = vmatprep.subr.mxu0 0.0
    %2262 = vmatpush2.msra.mxu0 0.0
    %2263 = vmatprep.subr.mxu0 0.0
    %2264 = vmatpush2.msra.mxu0 0.0
    %2265 = vmatprep.subr.mxu0 0.0
    %2266 = vmatpush2.msra.mxu0 0.0
    %2267 = vmatprep.subr.mxu0 0.0
    %2268 = vmatpush2.msra.mxu0 0.0
    %2269 = vmatprep.subr.mxu0 0.0
    %2270 = vmatpush2.msra.mxu0 0.0
    %2271 = vmatprep.subr.mxu0 0.0
    %2272 = vmatpush2.msra.mxu0 0.0
    %2273 = vmatprep.mubr.f32.mxu0 0.0
    %v2274 = vand.u32 %v2197, 4294901760
    %v2275 = vsub.f32 %v2197, %v2274
    %v2276 = vand.u32 %v2275, 4294901760
    %v2277 = vsub.f32 %v2275, %v2276
    %v2278 = vand.u32 %v2277, 4294901760
    %2279 = vmatmul.mubr.f32.gmra.mxu0 %v2278
    %v2280 = vpop.f32.mrf.mxu0
    %v2281 = vadd.f32 0.0, %v2280
    %v2282 = vpop.f32.mrf.mxu0
    %2283 = vmatprep.mubr.f32.mxu0 0.0
    %v2284 = vand.u32 %v2200, 4294901760
    %v2285 = vsub.f32 %v2200, %v2284
    %v2286 = vand.u32 %v2285, 4294901760
    %v2287 = vsub.f32 %v2285, %v2286
    %v2288 = vand.u32 %v2287, 4294901760
    %2289 = vmatmul.mubr.f32.gmra.mxu0 %v2288
    %v2290 = vpop.f32.mrf.mxu0
    %v2291 = vadd.f32 0.0, %v2290
    %v2292 = vpop.f32.mrf.mxu0
    %2293 = vmatprep.mubr.f32.mxu0 0.0
    %v2294 = vand.u32 %v2203, 4294901760
    %v2295 = vsub.f32 %v2203, %v2294
    %v2296 = vand.u32 %v2295, 4294901760
    %v2297 = vsub.f32 %v2295, %v2296
    %v2298 = vand.u32 %v2297, 4294901760
    %2299 = vmatmul.mubr.f32.gmra.mxu0 %v2298
    %v2300 = vpop.f32.mrf.mxu0
    %v2301 = vadd.f32 0.0, %v2300
    %v2302 = vpop.f32.mrf.mxu0
    %2303 = vmatprep.mubr.f32.mxu0 0.0
    %v2304 = vand.u32 %v2206, 4294901760
    %v2305 = vsub.f32 %v2206, %v2304
    %v2306 = vand.u32 %v2305, 4294901760
    %v2307 = vsub.f32 %v2305, %v2306
    %v2308 = vand.u32 %v2307, 4294901760
    %2309 = vmatmul.mubr.f32.gmra.mxu0 %v2308
    %v2310 = vpop.f32.mrf.mxu0
    %v2311 = vadd.f32 0.0, %v2310
    %v2312 = vpop.f32.mrf.mxu0
    %2313 = vdwg.mxu0
    %2314 = vmatprep.subr.mxu0 0.0
    %2315 = vmatpush1.msra.mxu0 0.0
    %2316 = vmatprep.subr.mxu0 0.0
    %2317 = vmatpush1.msra.mxu0 0.0
    %2318 = vmatprep.subr.mxu0 0.0
    %2319 = vmatpush1.msra.mxu0 0.0
    %2320 = vmatprep.subr.mxu0 0.0
    %2321 = vmatpush1.msra.mxu0 0.0
    %2322 = vmatprep.subr.mxu0 0.0
    %2323 = vmatpush1.msra.mxu0 0.0
    %2324 = vmatprep.subr.mxu0 0.0
    %2325 = vmatpush1.msra.mxu0 0.0
    %2326 = vmatprep.subr.mxu0 0.0
    %2327 = vmatpush1.msra.mxu0 0.0
    %2328 = vmatprep.subr.mxu0 0.0
    %2329 = vmatpush1.msra.mxu0 0.0
    %2330 = vmatprep.subr.mxu0 0.0
    %2331 = vmatpush1.msra.mxu0 0.0
    %2332 = vmatprep.subr.mxu0 0.0
    %2333 = vmatpush1.msra.mxu0 0.0
    %2334 = vmatprep.subr.mxu0 0.0
    %2335 = vmatpush1.msra.mxu0 0.0
    %2336 = vmatprep.subr.mxu0 0.0
    %2337 = vmatpush1.msra.mxu0 0.0
    %2338 = vmatprep.subr.mxu0 0.0
    %2339 = vmatpush1.msra.mxu0 0.0
    %2340 = vmatprep.subr.mxu0 0.0
    %2341 = vmatpush1.msra.mxu0 0.0
    %2342 = vmatprep.subr.mxu0 0.0
    %2343 = vmatpush1.msra.mxu0 0.0
    %2344 = vmatprep.subr.mxu0 0.0
    %v2345 = vand.u32 %v829, 4294901760
    %v2346 = vsub.f32 %v829, %v2345
    %v2347 = vand.u32 %v2346, 4294901760
    %v2348 = vsub.f32 %v2346, %v2347
    %v2349 = vand.u32 %v2348, 4294901760
    %2350 = vmatpush1.msra.mxu0 %v2349
    %2351 = vmatprep.subr.mxu0 0.0
    %2352 = vmatpush2.msra.mxu0 0.0
    %2353 = vmatprep.subr.mxu0 0.0
    %2354 = vmatpush2.msra.mxu0 0.0
    %2355 = vmatprep.subr.mxu0 0.0
    %2356 = vmatpush2.msra.mxu0 0.0
    %2357 = vmatprep.subr.mxu0 0.0
    %2358 = vmatpush2.msra.mxu0 0.0
    %2359 = vmatprep.subr.mxu0 0.0
    %2360 = vmatpush2.msra.mxu0 0.0
    %2361 = vmatprep.subr.mxu0 0.0
    %2362 = vmatpush2.msra.mxu0 0.0
    %2363 = vmatprep.subr.mxu0 0.0
    %2364 = vmatpush2.msra.mxu0 0.0
    %2365 = vmatprep.subr.mxu0 0.0
    %2366 = vmatpush2.msra.mxu0 0.0
    %2367 = vmatprep.subr.mxu0 0.0
    %2368 = vmatpush2.msra.mxu0 0.0
    %2369 = vmatprep.subr.mxu0 0.0
    %2370 = vmatpush2.msra.mxu0 0.0
    %2371 = vmatprep.subr.mxu0 0.0
    %2372 = vmatpush2.msra.mxu0 0.0
    %2373 = vmatprep.subr.mxu0 0.0
    %2374 = vmatpush2.msra.mxu0 0.0
    %2375 = vmatprep.subr.mxu0 0.0
    %2376 = vmatpush2.msra.mxu0 0.0
    %2377 = vmatprep.subr.mxu0 0.0
    %2378 = vmatpush2.msra.mxu0 0.0
    %2379 = vmatprep.subr.mxu0 0.0
    %2380 = vmatpush2.msra.mxu0 0.0
    %2381 = vmatprep.subr.mxu0 0.0
    %2382 = vmatpush2.msra.mxu0 0.0
    %2383 = vmatprep.mubr.f32.mxu0 0.0
    %v2384 = vand.u32 %v2197, 4294901760
    %2385 = vmatmul.mubr.f32.gmra.mxu0 %v2384
    %v2386 = vpop.f32.mrf.mxu0
    %v2387 = vadd.f32 %v2281, %v2386
    %v2388 = vpop.f32.mrf.mxu0
    %2389 = vmatprep.mubr.f32.mxu0 0.0
    %v2390 = vand.u32 %v2200, 4294901760
    %2391 = vmatmul.mubr.f32.gmra.mxu0 %v2390
    %v2392 = vpop.f32.mrf.mxu0
    %v2393 = vadd.f32 %v2291, %v2392
    %v2394 = vpop.f32.mrf.mxu0
    %2395 = vmatprep.mubr.f32.mxu0 0.0
    %v2396 = vand.u32 %v2203, 4294901760
    %2397 = vmatmul.mubr.f32.gmra.mxu0 %v2396
    %v2398 = vpop.f32.mrf.mxu0
    %v2399 = vadd.f32 %v2301, %v2398
    %v2400 = vpop.f32.mrf.mxu0
    %2401 = vmatprep.mubr.f32.mxu0 0.0
    %v2402 = vand.u32 %v2206, 4294901760
    %2403 = vmatmul.mubr.f32.gmra.mxu0 %v2402
    %v2404 = vpop.f32.mrf.mxu0
    %v2405 = vadd.f32 %v2311, %v2404
    %v2406 = vpop.f32.mrf.mxu0
    %2407 = vdwg.mxu0
    %2408 = vmatprep.subr.mxu0 0.0
    %2409 = vmatpush1.msra.mxu0 0.0
    %2410 = vmatprep.subr.mxu0 0.0
    %2411 = vmatpush1.msra.mxu0 0.0
    %2412 = vmatprep.subr.mxu0 0.0
    %2413 = vmatpush1.msra.mxu0 0.0
    %2414 = vmatprep.subr.mxu0 0.0
    %2415 = vmatpush1.msra.mxu0 0.0
    %2416 = vmatprep.subr.mxu0 0.0
    %2417 = vmatpush1.msra.mxu0 0.0
    %2418 = vmatprep.subr.mxu0 0.0
    %2419 = vmatpush1.msra.mxu0 0.0
    %2420 = vmatprep.subr.mxu0 0.0
    %2421 = vmatpush1.msra.mxu0 0.0
    %2422 = vmatprep.subr.mxu0 0.0
    %2423 = vmatpush1.msra.mxu0 0.0
    %2424 = vmatprep.subr.mxu0 0.0
    %2425 = vmatpush1.msra.mxu0 0.0
    %2426 = vmatprep.subr.mxu0 0.0
    %2427 = vmatpush1.msra.mxu0 0.0
    %2428 = vmatprep.subr.mxu0 0.0
    %2429 = vmatpush1.msra.mxu0 0.0
    %2430 = vmatprep.subr.mxu0 0.0
    %2431 = vmatpush1.msra.mxu0 0.0
    %2432 = vmatprep.subr.mxu0 0.0
    %2433 = vmatpush1.msra.mxu0 0.0
    %2434 = vmatprep.subr.mxu0 0.0
    %2435 = vmatpush1.msra.mxu0 0.0
    %2436 = vmatprep.subr.mxu0 0.0
    %2437 = vmatpush1.msra.mxu0 0.0
    %2438 = vmatprep.subr.mxu0 0.0
    %v2439 = vand.u32 %v829, 4294901760
    %v2440 = vsub.f32 %v829, %v2439
    %2441 = vmatpush1.msra.mxu0 %v2440
    %2442 = vmatprep.subr.mxu0 0.0
    %2443 = vmatpush2.msra.mxu0 0.0
    %2444 = vmatprep.subr.mxu0 0.0
    %2445 = vmatpush2.msra.mxu0 0.0
    %2446 = vmatprep.subr.mxu0 0.0
    %2447 = vmatpush2.msra.mxu0 0.0
    %2448 = vmatprep.subr.mxu0 0.0
    %2449 = vmatpush2.msra.mxu0 0.0
    %2450 = vmatprep.subr.mxu0 0.0
    %2451 = vmatpush2.msra.mxu0 0.0
    %2452 = vmatprep.subr.mxu0 0.0
    %2453 = vmatpush2.msra.mxu0 0.0
    %2454 = vmatprep.subr.mxu0 0.0
    %2455 = vmatpush2.msra.mxu0 0.0
    %2456 = vmatprep.subr.mxu0 0.0
    %2457 = vmatpush2.msra.mxu0 0.0
    %2458 = vmatprep.subr.mxu0 0.0
    %2459 = vmatpush2.msra.mxu0 0.0
    %2460 = vmatprep.subr.mxu0 0.0
    %2461 = vmatpush2.msra.mxu0 0.0
    %2462 = vmatprep.subr.mxu0 0.0
    %2463 = vmatpush2.msra.mxu0 0.0
    %2464 = vmatprep.subr.mxu0 0.0
    %2465 = vmatpush2.msra.mxu0 0.0
    %2466 = vmatprep.subr.mxu0 0.0
    %2467 = vmatpush2.msra.mxu0 0.0
    %2468 = vmatprep.subr.mxu0 0.0
    %2469 = vmatpush2.msra.mxu0 0.0
    %2470 = vmatprep.subr.mxu0 0.0
    %2471 = vmatpush2.msra.mxu0 0.0
    %2472 = vmatprep.subr.mxu0 0.0
    %2473 = vmatpush2.msra.mxu0 0.0
    %2474 = vmatprep.mubr.f32.mxu0 0.0
    %v2475 = vand.u32 %v2197, 4294901760
    %v2476 = vsub.f32 %v2197, %v2475
    %2477 = vmatmul.mubr.f32.gmra.mxu0 %v2476
    %v2478 = vpop.f32.mrf.mxu0
    %v2479 = vadd.f32 %v2387, %v2478
    %v2480 = vpop.f32.mrf.mxu0
    %2481 = vmatprep.mubr.f32.mxu0 0.0
    %v2482 = vand.u32 %v2200, 4294901760
    %v2483 = vsub.f32 %v2200, %v2482
    %2484 = vmatmul.mubr.f32.gmra.mxu0 %v2483
    %v2485 = vpop.f32.mrf.mxu0
    %v2486 = vadd.f32 %v2393, %v2485
    %v2487 = vpop.f32.mrf.mxu0
    %2488 = vmatprep.mubr.f32.mxu0 0.0
    %v2489 = vand.u32 %v2203, 4294901760
    %v2490 = vsub.f32 %v2203, %v2489
    %2491 = vmatmul.mubr.f32.gmra.mxu0 %v2490
    %v2492 = vpop.f32.mrf.mxu0
    %v2493 = vadd.f32 %v2399, %v2492
    %v2494 = vpop.f32.mrf.mxu0
    %2495 = vmatprep.mubr.f32.mxu0 0.0
    %v2496 = vand.u32 %v2206, 4294901760
    %v2497 = vsub.f32 %v2206, %v2496
    %2498 = vmatmul.mubr.f32.gmra.mxu0 %v2497
    %v2499 = vpop.f32.mrf.mxu0
    %v2500 = vadd.f32 %v2405, %v2499
    %v2501 = vpop.f32.mrf.mxu0
    %2502 = vdwg.mxu0
    %2503 = vmatprep.subr.mxu0 0.0
    %2504 = vmatpush1.msra.mxu0 0.0
    %2505 = vmatprep.subr.mxu0 0.0
    %2506 = vmatpush1.msra.mxu0 0.0
    %2507 = vmatprep.subr.mxu0 0.0
    %2508 = vmatpush1.msra.mxu0 0.0
    %2509 = vmatprep.subr.mxu0 0.0
    %2510 = vmatpush1.msra.mxu0 0.0
    %2511 = vmatprep.subr.mxu0 0.0
    %2512 = vmatpush1.msra.mxu0 0.0
    %2513 = vmatprep.subr.mxu0 0.0
    %2514 = vmatpush1.msra.mxu0 0.0
    %2515 = vmatprep.subr.mxu0 0.0
    %2516 = vmatpush1.msra.mxu0 0.0
    %2517 = vmatprep.subr.mxu0 0.0
    %2518 = vmatpush1.msra.mxu0 0.0
    %2519 = vmatprep.subr.mxu0 0.0
    %2520 = vmatpush1.msra.mxu0 0.0
    %2521 = vmatprep.subr.mxu0 0.0
    %2522 = vmatpush1.msra.mxu0 0.0
    %2523 = vmatprep.subr.mxu0 0.0
    %2524 = vmatpush1.msra.mxu0 0.0
    %2525 = vmatprep.subr.mxu0 0.0
    %2526 = vmatpush1.msra.mxu0 0.0
    %2527 = vmatprep.subr.mxu0 0.0
    %2528 = vmatpush1.msra.mxu0 0.0
    %2529 = vmatprep.subr.mxu0 0.0
    %2530 = vmatpush1.msra.mxu0 0.0
    %2531 = vmatprep.subr.mxu0 0.0
    %2532 = vmatpush1.msra.mxu0 0.0
    %2533 = vmatprep.subr.mxu0 0.0
    %v2534 = vand.u32 %v829, 4294901760
    %2535 = vmatpush1.msra.mxu0 %v2534
    %2536 = vmatprep.subr.mxu0 0.0
    %2537 = vmatpush2.msra.mxu0 0.0
    %2538 = vmatprep.subr.mxu0 0.0
    %2539 = vmatpush2.msra.mxu0 0.0
    %2540 = vmatprep.subr.mxu0 0.0
    %2541 = vmatpush2.msra.mxu0 0.0
    %2542 = vmatprep.subr.mxu0 0.0
    %2543 = vmatpush2.msra.mxu0 0.0
    %2544 = vmatprep.subr.mxu0 0.0
    %2545 = vmatpush2.msra.mxu0 0.0
    %2546 = vmatprep.subr.mxu0 0.0
    %2547 = vmatpush2.msra.mxu0 0.0
    %2548 = vmatprep.subr.mxu0 0.0
    %2549 = vmatpush2.msra.mxu0 0.0
    %2550 = vmatprep.subr.mxu0 0.0
    %2551 = vmatpush2.msra.mxu0 0.0
    %2552 = vmatprep.subr.mxu0 0.0
    %2553 = vmatpush2.msra.mxu0 0.0
    %2554 = vmatprep.subr.mxu0 0.0
    %2555 = vmatpush2.msra.mxu0 0.0
    %2556 = vmatprep.subr.mxu0 0.0
    %2557 = vmatpush2.msra.mxu0 0.0
    %2558 = vmatprep.subr.mxu0 0.0
    %2559 = vmatpush2.msra.mxu0 0.0
    %2560 = vmatprep.subr.mxu0 0.0
    %2561 = vmatpush2.msra.mxu0 0.0
    %2562 = vmatprep.subr.mxu0 0.0
    %2563 = vmatpush2.msra.mxu0 0.0
    %2564 = vmatprep.subr.mxu0 0.0
    %2565 = vmatpush2.msra.mxu0 0.0
    %2566 = vmatprep.subr.mxu0 0.0
    %2567 = vmatpush2.msra.mxu0 0.0
    %2568 = vmatprep.mubr.f32.mxu0 0.0
    %v2569 = vand.u32 %v2197, 4294901760
    %v2570 = vsub.f32 %v2197, %v2569
    %v2571 = vand.u32 %v2570, 4294901760
    %2572 = vmatmul.mubr.f32.gmra.mxu0 %v2571
    %v2573 = vpop.f32.mrf.mxu0
    %v2574 = vadd.f32 %v2479, %v2573
    %v2575 = vpop.f32.mrf.mxu0
    %2576 = vmatprep.mubr.f32.mxu0 0.0
    %v2577 = vand.u32 %v2200, 4294901760
    %v2578 = vsub.f32 %v2200, %v2577
    %v2579 = vand.u32 %v2578, 4294901760
    %2580 = vmatmul.mubr.f32.gmra.mxu0 %v2579
    %v2581 = vpop.f32.mrf.mxu0
    %v2582 = vadd.f32 %v2486, %v2581
    %v2583 = vpop.f32.mrf.mxu0
    %2584 = vmatprep.mubr.f32.mxu0 0.0
    %v2585 = vand.u32 %v2203, 4294901760
    %v2586 = vsub.f32 %v2203, %v2585
    %v2587 = vand.u32 %v2586, 4294901760
    %2588 = vmatmul.mubr.f32.gmra.mxu0 %v2587
    %v2589 = vpop.f32.mrf.mxu0
    %v2590 = vadd.f32 %v2493, %v2589
    %v2591 = vpop.f32.mrf.mxu0
    %2592 = vmatprep.mubr.f32.mxu0 0.0
    %v2593 = vand.u32 %v2206, 4294901760
    %v2594 = vsub.f32 %v2206, %v2593
    %v2595 = vand.u32 %v2594, 4294901760
    %2596 = vmatmul.mubr.f32.gmra.mxu0 %v2595
    %v2597 = vpop.f32.mrf.mxu0
    %v2598 = vadd.f32 %v2500, %v2597
    %v2599 = vpop.f32.mrf.mxu0
    %2600 = vdwg.mxu0
    %2601 = vmatprep.subr.mxu0 0.0
    %2602 = vmatpush1.msra.mxu0 0.0
    %2603 = vmatprep.subr.mxu0 0.0
    %2604 = vmatpush1.msra.mxu0 0.0
    %2605 = vmatprep.subr.mxu0 0.0
    %2606 = vmatpush1.msra.mxu0 0.0
    %2607 = vmatprep.subr.mxu0 0.0
    %2608 = vmatpush1.msra.mxu0 0.0
    %2609 = vmatprep.subr.mxu0 0.0
    %2610 = vmatpush1.msra.mxu0 0.0
    %2611 = vmatprep.subr.mxu0 0.0
    %2612 = vmatpush1.msra.mxu0 0.0
    %2613 = vmatprep.subr.mxu0 0.0
    %2614 = vmatpush1.msra.mxu0 0.0
    %2615 = vmatprep.subr.mxu0 0.0
    %2616 = vmatpush1.msra.mxu0 0.0
    %2617 = vmatprep.subr.mxu0 0.0
    %2618 = vmatpush1.msra.mxu0 0.0
    %2619 = vmatprep.subr.mxu0 0.0
    %2620 = vmatpush1.msra.mxu0 0.0
    %2621 = vmatprep.subr.mxu0 0.0
    %2622 = vmatpush1.msra.mxu0 0.0
    %2623 = vmatprep.subr.mxu0 0.0
    %2624 = vmatpush1.msra.mxu0 0.0
    %2625 = vmatprep.subr.mxu0 0.0
    %2626 = vmatpush1.msra.mxu0 0.0
    %2627 = vmatprep.subr.mxu0 0.0
    %2628 = vmatpush1.msra.mxu0 0.0
    %2629 = vmatprep.subr.mxu0 0.0
    %2630 = vmatpush1.msra.mxu0 0.0
    %2631 = vmatprep.subr.mxu0 0.0
    %v2632 = vand.u32 %v829, 4294901760
    %v2633 = vsub.f32 %v829, %v2632
    %v2634 = vand.u32 %v2633, 4294901760
    %2635 = vmatpush1.msra.mxu0 %v2634
    %2636 = vmatprep.subr.mxu0 0.0
    %2637 = vmatpush2.msra.mxu0 0.0
    %2638 = vmatprep.subr.mxu0 0.0
    %2639 = vmatpush2.msra.mxu0 0.0
    %2640 = vmatprep.subr.mxu0 0.0
    %2641 = vmatpush2.msra.mxu0 0.0
    %2642 = vmatprep.subr.mxu0 0.0
    %2643 = vmatpush2.msra.mxu0 0.0
    %2644 = vmatprep.subr.mxu0 0.0
    %2645 = vmatpush2.msra.mxu0 0.0
    %2646 = vmatprep.subr.mxu0 0.0
    %2647 = vmatpush2.msra.mxu0 0.0
    %2648 = vmatprep.subr.mxu0 0.0
    %2649 = vmatpush2.msra.mxu0 0.0
    %2650 = vmatprep.subr.mxu0 0.0
    %2651 = vmatpush2.msra.mxu0 0.0
    %2652 = vmatprep.subr.mxu0 0.0
    %2653 = vmatpush2.msra.mxu0 0.0
    %2654 = vmatprep.subr.mxu0 0.0
    %2655 = vmatpush2.msra.mxu0 0.0
    %2656 = vmatprep.subr.mxu0 0.0
    %2657 = vmatpush2.msra.mxu0 0.0
    %2658 = vmatprep.subr.mxu0 0.0
    %2659 = vmatpush2.msra.mxu0 0.0
    %2660 = vmatprep.subr.mxu0 0.0
    %2661 = vmatpush2.msra.mxu0 0.0
    %2662 = vmatprep.subr.mxu0 0.0
    %2663 = vmatpush2.msra.mxu0 0.0
    %2664 = vmatprep.subr.mxu0 0.0
    %2665 = vmatpush2.msra.mxu0 0.0
    %2666 = vmatprep.subr.mxu0 0.0
    %2667 = vmatpush2.msra.mxu0 0.0
    %2668 = vmatprep.mubr.f32.mxu0 0.0
    %v2669 = vand.u32 %v2197, 4294901760
    %2670 = vmatmul.mubr.f32.gmra.mxu0 %v2669
    %v2671 = vpop.f32.mrf.mxu0
    %v2672 = vadd.f32 %v2574, %v2671
    %v2673 = vpop.f32.mrf.mxu0
    %2674 = vmatprep.mubr.f32.mxu0 0.0
    %v2675 = vand.u32 %v2200, 4294901760
    %2676 = vmatmul.mubr.f32.gmra.mxu0 %v2675
    %v2677 = vpop.f32.mrf.mxu0
    %v2678 = vadd.f32 %v2582, %v2677
    %v2679 = vpop.f32.mrf.mxu0
    %2680 = vmatprep.mubr.f32.mxu0 0.0
    %v2681 = vand.u32 %v2203, 4294901760
    %2682 = vmatmul.mubr.f32.gmra.mxu0 %v2681
    %v2683 = vpop.f32.mrf.mxu0
    %v2684 = vadd.f32 %v2590, %v2683
    %v2685 = vpop.f32.mrf.mxu0
    %2686 = vmatprep.mubr.f32.mxu0 0.0
    %v2687 = vand.u32 %v2206, 4294901760
    %2688 = vmatmul.mubr.f32.gmra.mxu0 %v2687
    %v2689 = vpop.f32.mrf.mxu0
    %v2690 = vadd.f32 %v2598, %v2689
    %v2691 = vpop.f32.mrf.mxu0
    %2692 = vdwg.mxu0
    %2693 = vmatprep.subr.mxu0 0.0
    %2694 = vmatpush1.msra.mxu0 0.0
    %2695 = vmatprep.subr.mxu0 0.0
    %2696 = vmatpush1.msra.mxu0 0.0
    %2697 = vmatprep.subr.mxu0 0.0
    %2698 = vmatpush1.msra.mxu0 0.0
    %2699 = vmatprep.subr.mxu0 0.0
    %2700 = vmatpush1.msra.mxu0 0.0
    %2701 = vmatprep.subr.mxu0 0.0
    %2702 = vmatpush1.msra.mxu0 0.0
    %2703 = vmatprep.subr.mxu0 0.0
    %2704 = vmatpush1.msra.mxu0 0.0
    %2705 = vmatprep.subr.mxu0 0.0
    %2706 = vmatpush1.msra.mxu0 0.0
    %2707 = vmatprep.subr.mxu0 0.0
    %2708 = vmatpush1.msra.mxu0 0.0
    %2709 = vmatprep.subr.mxu0 0.0
    %2710 = vmatpush1.msra.mxu0 0.0
    %2711 = vmatprep.subr.mxu0 0.0
    %2712 = vmatpush1.msra.mxu0 0.0
    %2713 = vmatprep.subr.mxu0 0.0
    %2714 = vmatpush1.msra.mxu0 0.0
    %2715 = vmatprep.subr.mxu0 0.0
    %2716 = vmatpush1.msra.mxu0 0.0
    %2717 = vmatprep.subr.mxu0 0.0
    %2718 = vmatpush1.msra.mxu0 0.0
    %2719 = vmatprep.subr.mxu0 0.0
    %2720 = vmatpush1.msra.mxu0 0.0
    %2721 = vmatprep.subr.mxu0 0.0
    %2722 = vmatpush1.msra.mxu0 0.0
    %2723 = vmatprep.subr.mxu0 0.0
    %v2724 = vand.u32 %v829, 4294901760
    %2725 = vmatpush1.msra.mxu0 %v2724
    %2726 = vmatprep.subr.mxu0 0.0
    %2727 = vmatpush2.msra.mxu0 0.0
    %2728 = vmatprep.subr.mxu0 0.0
    %2729 = vmatpush2.msra.mxu0 0.0
    %2730 = vmatprep.subr.mxu0 0.0
    %2731 = vmatpush2.msra.mxu0 0.0
    %2732 = vmatprep.subr.mxu0 0.0
    %2733 = vmatpush2.msra.mxu0 0.0
    %2734 = vmatprep.subr.mxu0 0.0
    %2735 = vmatpush2.msra.mxu0 0.0
    %2736 = vmatprep.subr.mxu0 0.0
    %2737 = vmatpush2.msra.mxu0 0.0
    %2738 = vmatprep.subr.mxu0 0.0
    %2739 = vmatpush2.msra.mxu0 0.0
    %2740 = vmatprep.subr.mxu0 0.0
    %2741 = vmatpush2.msra.mxu0 0.0
    %2742 = vmatprep.subr.mxu0 0.0
    %2743 = vmatpush2.msra.mxu0 0.0
    %2744 = vmatprep.subr.mxu0 0.0
    %2745 = vmatpush2.msra.mxu0 0.0
    %2746 = vmatprep.subr.mxu0 0.0
    %2747 = vmatpush2.msra.mxu0 0.0
    %2748 = vmatprep.subr.mxu0 0.0
    %2749 = vmatpush2.msra.mxu0 0.0
    %2750 = vmatprep.subr.mxu0 0.0
    %2751 = vmatpush2.msra.mxu0 0.0
    %2752 = vmatprep.subr.mxu0 0.0
    %2753 = vmatpush2.msra.mxu0 0.0
    %2754 = vmatprep.subr.mxu0 0.0
    %2755 = vmatpush2.msra.mxu0 0.0
    %2756 = vmatprep.subr.mxu0 0.0
    %2757 = vmatpush2.msra.mxu0 0.0
    %2758 = vmatprep.mubr.f32.mxu0 0.0
    %v2759 = vand.u32 %v2197, 4294901760
    %2760 = vmatmul.mubr.f32.gmra.mxu0 %v2759
    %v2761 = vpop.f32.mrf.mxu0
    %v2762 = vadd.f32 %v2672, %v2761
    %v2763 = vpop.f32.mrf.mxu0
    %2764 = vmatprep.mubr.f32.mxu0 0.0
    %v2765 = vand.u32 %v2200, 4294901760
    %2766 = vmatmul.mubr.f32.gmra.mxu0 %v2765
    %v2767 = vpop.f32.mrf.mxu0
    %v2768 = vadd.f32 %v2678, %v2767
    %v2769 = vpop.f32.mrf.mxu0
    %2770 = vmatprep.mubr.f32.mxu0 0.0
    %v2771 = vand.u32 %v2203, 4294901760
    %2772 = vmatmul.mubr.f32.gmra.mxu0 %v2771
    %v2773 = vpop.f32.mrf.mxu0
    %v2774 = vadd.f32 %v2684, %v2773
    %v2775 = vpop.f32.mrf.mxu0
    %2776 = vmatprep.mubr.f32.mxu0 0.0
    %v2777 = vand.u32 %v2206, 4294901760
    %2778 = vmatmul.mubr.f32.gmra.mxu0 %v2777
    %v2779 = vpop.f32.mrf.mxu0
    %v2780 = vadd.f32 %v2690, %v2779
    %v2781 = vpop.f32.mrf.mxu0
    %2782 = vdwg.mxu0
    %v2783 = vmul.f32 %v18, %v2762
    %v2784 = vmul.f32 %v19, %v2768
    %v2785 = vmul.f32 %v20, %v2774
    %v2786 = vmul.f32 %v21, %v2780
    %v2788 = vlaneseq
    %v2789 = vshrl.u32 %v2788, 7
    %v2790 = vsub.s32 0, %v2789
    %v2791 = vrot.slane %v22, %v2790
    %v2793 = vmul.f32 %v2783, %v2791
    %v2794 = vmul.f32 %v2784, %v2791
    %v2795 = vmul.f32 %v2785, %v2791
    %v2796 = vmul.f32 %v2786, %v2791
    %2797 = vst [vmem:[#allocation2] sm:$0xff] %v2793
    %2798 = vst [vmem:[#allocation2 + $0x8] sm:$0xff] %v2794
    %2799 = vst [vmem:[#allocation2 + $0x10] sm:$0xff] %v2795
    %2800 = vst [vmem:[#allocation2 + $0x18] sm:$0xff] %v2796
    // Predicated region
    $region18: #{tpu_custom_call.1} parent=1 // pred_check
      _
    $region19: #{tpu_custom_call.1} parent=1 // pred_check_branch
      %2802 = sbr.rel (0) target = $region21
    $region20: #{tpu_custom_call.1} parent=1 // pred_region
      %s2804 = ssub.s32 512, 512
      %2805 = vsyncadd [#allocation3], %s2804
      %s2806 = sshll.u32 [#allocation2], 4
      %s2807 = int_to_ptr.vmem [resolvable:$true] %s2806
      %2812 = dma.vmem_to_hbm [thread:$0]  %s2807, 512, %s4, [#allocation3], 128, 128, 8
    $region21: #{tpu_custom_call.1} parent=1 // pred_fallthru
      _
    // Predicated region
    $region22: #{tpu_custom_call.1} parent=1 // pred_check
      _
    $region23: #{tpu_custom_call.1} parent=1 // pred_check_branch
      %2814 = sbr.rel (0) target = $region25
    $region24: #{tpu_custom_call.1} parent=1 // pred_region
      %2815 = dma.done [#allocation3], 512
    $region25: #{tpu_custom_call.1} parent=1 // pred_fallthru
      _
    %2816 = vsyncpa [#allocation3], 1

</llo_original>
